<compile_context>
chip_gen: v6e
topology: v6e:2x2x1
jax: 0.10.0
libtpu: 0.0.40
codegen_flags: <defaults>
</compile_context>

<pallas_src>
import jax
import jax.numpy as jnp
from jax.experimental import pallas as pl
from jax.experimental.pallas import tpu as pltpu

ID_FEAT_DIM = 512                      # IDnet embedding size
LND_FEAT_DIM = 102                     # LNDnet embedding size (614 - 512)
CAT_DIM = ID_FEAT_DIM + LND_FEAT_DIM   # 614, input of nn.Linear(614, 512)
OUT_DIM = 512

TB = 16    # batch (row) tile: bf16 sublane-aligned.  For production video
           # workloads raise to 128-256 (MXU rows) and feed many frames/call.
TK = 256   # K tile over the flattened image features (weights are streamed).


def _round_up(x, m):
    return (x + m - 1) // m * m


def _dva_kernel(id_ref, lnd_ref, wid_ref, wlf_ref, w1_ref, bid_ref, bf_ref,
                feats_ref, idf_ref, acc_id, acc_ft):
    """Grid = (batch tiles, K tiles); K is the reduction ('arbitrary') axis.

    id_ref  : [TB, TK]     bf16  flattened id image tile
    lnd_ref : [TB, TK]     bf16  flattened landmark image tile
    wid_ref : [TK, 512]    bf16  IDnet stand-in projection tile
    wlf_ref : [TK, 512]    bf16  fused (w_lnd @ W2) projection tile
    w1_ref  : [512, 512]   bf16  top-512 rows of Linear(614,512).weight.T
    bid_ref : [1, 512]     f32   IDnet bias
    bf_ref  : [1, 512]     f32   fused bias (b_lnd @ W2 + b)
    feats_ref, idf_ref : [TB, 512] f32 outputs
    acc_id, acc_ft     : [TB, 512] f32 VMEM accumulators
    """
    k = pl.program_id(1)

    @pl.when(k == 0)
    def _():
        acc_id[...] = jnp.zeros_like(acc_id)
        acc_ft[...] = jnp.zeros_like(acc_ft)

    # id_feats partial:  id @ w_id              (bf16 operands, f32 accum)
    acc_id[...] += jnp.dot(id_ref[...], wid_ref[...],
                           preferred_element_type=jnp.float32)
    # feats partial from the folded LND path:  lnd @ (w_lnd @ W2)
    acc_ft[...] += jnp.dot(lnd_ref[...], wlf_ref[...],
                           preferred_element_type=jnp.float32)

    @pl.when(k == pl.num_programs(1) - 1)
    def _():
        # Bias adds + the small 512x512 matmul happen once per output tile.
        id_feats = acc_id[...] + bid_ref[...]
        feats = (acc_ft[...]
                 + jnp.dot(id_feats.astype(w1_ref.dtype), w1_ref[...],
                           preferred_element_type=jnp.float32)
                 + bf_ref[...])
        idf_ref[...] = id_feats
        feats_ref[...] = feats


class DiffusionVideoAutoencoderPallas:
    """JAX/Pallas re-implementation of DiffusionVideoAutoencoder.forward."""

    def __init__(self, key, img_channels=3, img_hw=16):
        f_img = img_channels * img_hw * img_hw
        ks = jax.random.split(key, 6)

        def uniform(k, shape, fan_in):
            bound = 1.0 / jnp.sqrt(fan_in)
            return jax.random.uniform(k, shape, jnp.float32, -bound, bound)

        # Frozen stand-in IDnet / LNDnet backbones (f32 "truth" params).
        w_id = uniform(ks[0], (f_img, ID_FEAT_DIM), f_img)
        b_id = uniform(ks[1], (1, ID_FEAT_DIM), f_img)
        w_lnd = uniform(ks[2], (f_img, LND_FEAT_DIM), f_img)
        b_lnd = uniform(ks[3], (1, LND_FEAT_DIM), f_img)

        # nn.Linear(614, 512): weight [512, 614]; stored transposed + split.
        w_lin_t = uniform(ks[4], (CAT_DIM, OUT_DIM), CAT_DIM)   # weight.T
        b_lin = uniform(ks[5], (1, OUT_DIM), CAT_DIM)
        w1 = w_lin_t[:ID_FEAT_DIM, :]                           # [512, 512]
        w2 = w_lin_t[ID_FEAT_DIM:, :]                           # [102, 512]

        # --- Algebraic fold of the frozen LND path (exact, done in f32) ---
        # Removes the 102-lane intermediate (not a multiple of 128) entirely.
        w_lnd_fused = w_lnd @ w2                                 # [f_img, 512]
        b_fused = b_lnd @ w2 + b_lin                             # [1, 512]

        # Zero-pad the K axis to a TK multiple so the K-tiled grid is exact.
        f_pad = _round_up(f_img, TK)
        pad_k = f_pad - f_img
        w_id_pad = jnp.pad(w_id, ((0, pad_k), (0, 0)))
        w_lnd_fused_pad = jnp.pad(w_lnd_fused, ((0, pad_k), (0, 0)))

        # bf16 operand copies for the MXU (accumulation stays f32 in-kernel).
        self.w_id_bf16 = w_id_pad.astype(jnp.bfloat16)
        self.w_lnd_fused_bf16 = w_lnd_fused_pad.astype(jnp.bfloat16)
        self.w1_bf16 = w1.astype(jnp.bfloat16)
        self.b_id = b_id
        self.b_fused = b_fused

        # Exact f32 params kept for the reference checks.
        self._f32 = dict(w_id=w_id, b_id=b_id, w_lnd=w_lnd, b_lnd=b_lnd,
                         w1=w1, w2=w2, b=b_lin)

        self._f_img = f_img
        self._f_pad = f_pad

    def forward(self, id_img, lnd_img=None, return_id_feats=False):
        if lnd_img is None:
            lnd_img = id_img
        B = id_img.shape[0]
        b_pad = _round_up(max(B, 1), TB)

        def prep(img):
            x = img.reshape(B, -1).astype(jnp.bfloat16)
            return jnp.pad(x, ((0, b_pad - B), (0, self._f_pad - self._f_img)))

        id_flat = prep(id_img)
        lnd_flat = prep(lnd_img)

        grid = (b_pad // TB, self._f_pad // TK)

        flops = (2 * b_pad * self._f_pad * OUT_DIM * 2      # two K matmuls
                 + 2 * b_pad * OUT_DIM * OUT_DIM)           # w1 matmul
        bytes_accessed = (2 * b_pad * self._f_pad * 2       # images (bf16)
                          + 2 * self._f_pad * OUT_DIM * 2   # streamed weights
                          + OUT_DIM * OUT_DIM * 2           # w1
                          + 2 * OUT_DIM * 4                 # biases
                          + 2 * b_pad * OUT_DIM * 4)        # outputs

        feats, id_feats = pl.pallas_call(
            _dva_kernel,
            out_shape=(
                jax.ShapeDtypeStruct((b_pad, OUT_DIM), jnp.float32),
                jax.ShapeDtypeStruct((b_pad, ID_FEAT_DIM), jnp.float32),
            ),
            grid_spec=pltpu.PrefetchScalarGridSpec(
                num_scalar_prefetch=0,
                grid=grid,
                in_specs=[
                    pl.BlockSpec((TB, TK), lambda i, k: (i, k)),           # id
                    pl.BlockSpec((TB, TK), lambda i, k: (i, k)),           # lnd
                    pl.BlockSpec((TK, OUT_DIM), lambda i, k: (k, 0)),      # w_id
                    pl.BlockSpec((TK, OUT_DIM), lambda i, k: (k, 0)),      # w_lnd_fused
                    pl.BlockSpec((OUT_DIM, OUT_DIM), lambda i, k: (0, 0)), # w1
                    pl.BlockSpec((1, OUT_DIM), lambda i, k: (0, 0)),       # b_id
                    pl.BlockSpec((1, OUT_DIM), lambda i, k: (0, 0)),       # b_fused
                ],
                out_specs=[
                    pl.BlockSpec((TB, OUT_DIM), lambda i, k: (i, 0)),      # feats
                    pl.BlockSpec((TB, OUT_DIM), lambda i, k: (i, 0)),      # id_feats
                ],
                scratch_shapes=[
                    pltpu.VMEM((TB, OUT_DIM), jnp.float32),
                    pltpu.VMEM((TB, OUT_DIM), jnp.float32),
                ],
            ),
            compiler_params=pltpu.CompilerParams(
                dimension_semantics=("parallel", "arbitrary"),
            ),
            cost_estimate=pl.CostEstimate(
                flops=flops, transcendentals=0, bytes_accessed=bytes_accessed),
        )(id_flat, lnd_flat,
          self.w_id_bf16, self.w_lnd_fused_bf16, self.w1_bf16,
          self.b_id, self.b_fused)

        feats = feats[:B]
        id_feats = id_feats[:B]
        if return_id_feats:
            return feats, id_feats
        return feats

    # face_mask(bg) -> BGnet(bg): external segmentation backbone.
    # TODO(synk): BGnet / face_mask has no in-module definition to translate.


def _reference_bf16(model, id_img, lnd_img):
    """Pure-JAX model with the *same* bf16 operands / f32 accumulation."""
    B = id_img.shape[0]
    f = model._f_img
    id_flat = id_img.reshape(B, -1).astype(jnp.bfloat16)
    lnd_flat = lnd_img.reshape(B, -1).astype(jnp.bfloat16)
    id_feats = (jnp.dot(id_flat, model.w_id_bf16[:f],
                        preferred_element_type=jnp.float32) + model.b_id)
    feats = (jnp.dot(lnd_flat, model.w_lnd_fused_bf16[:f],
                     preferred_element_type=jnp.float32)
             + jnp.dot(id_feats.astype(jnp.bfloat16), model.w1_bf16,
                       preferred_element_type=jnp.float32)
             + model.b_fused)
    return feats, id_feats


def _reference_f32(model, id_img, lnd_img):
    """Original module semantics: f32 backbones + concat + Linear(614, 512)."""
    p = model._f32
    B = id_img.shape[0]
    id_flat = id_img.reshape(B, -1)
    lnd_flat = lnd_img.reshape(B, -1)
    id_feats = id_flat @ p["w_id"] + p["b_id"]
    lnd_feats = lnd_flat @ p["w_lnd"] + p["b_lnd"]
    cat = jnp.concatenate([id_feats, lnd_feats], axis=1)
    w_full = jnp.concatenate([p["w1"], p["w2"]], axis=0)
    feats = cat @ w_full + p["b"]
    return feats, id_feats


if __name__ == "__main__":
    key = jax.random.PRNGKey(0)
    k_param, k_id, k_lnd = jax.random.split(key, 3)

    model = DiffusionVideoAutoencoderPallas(k_param, img_channels=3, img_hw=16)

    # Small synthetic inputs (NCHW, like the PyTorch module).
    id_img = jax.random.normal(k_id, (2, 3, 16, 16), jnp.float32)
    lnd_img = jax.random.normal(k_lnd, (2, 3, 16, 16), jnp.float32)

    feats, id_feats = model.forward(id_img, lnd_img, return_id_feats=True)
    feats = jax.block_until_ready(feats)
    id_feats = jax.block_until_ready(id_feats)

    assert feats.shape == (2, OUT_DIM)
    assert id_feats.shape == (2, ID_FEAT_DIM)

    # (a) Strict check against a pure-JAX model using identical bf16 operands.
    ref_feats, ref_id_feats = _reference_bf16(model, id_img, lnd_img)
    assert jnp.allclose(feats, ref_feats, atol=1e-2, rtol=1e-2)
    assert jnp.allclose(id_feats, ref_id_feats, atol=1e-2, rtol=1e-2)

    # (b) Looser check against the original f32 concat+Linear semantics:
    #     validates that the frozen-LND fold / 614-split is algebraically
    #     exact; the only delta is bf16 operand rounding of frozen weights.
    ref_feats32, ref_id_feats32 = _reference_f32(model, id_img, lnd_img)
    assert jnp.allclose(feats, ref_feats32, atol=5e-2, rtol=5e-2)
    assert jnp.allclose(id_feats, ref_id_feats32, atol=5e-2, rtol=5e-2)

    print("KERNEL_OK")
</pallas_src>

<mosaic_0001>
module attributes {stable_mosaic.version = 11 : i64} {
  func.func @_dva_kernel(%arg0: i32, %arg1: i32, %arg2: memref<16x256xbf16, #tpu.memory_space<vmem>>, %arg3: memref<16x256xbf16, #tpu.memory_space<vmem>>, %arg4: memref<256x512xbf16, #tpu.memory_space<vmem>>, %arg5: memref<256x512xbf16, #tpu.memory_space<vmem>>, %arg6: memref<512x512xbf16, #tpu.memory_space<vmem>>, %arg7: memref<1x512xf32, #tpu.memory_space<vmem>>, %arg8: memref<1x512xf32, #tpu.memory_space<vmem>>, %arg9: memref<16x512xf32, #tpu.memory_space<vmem>>, %arg10: memref<16x512xf32, #tpu.memory_space<vmem>>, %arg11: memref<16x512xf32, #tpu.memory_space<vmem>>, %arg12: memref<16x512xf32, #tpu.memory_space<vmem>>) attributes {dimension_semantics = [#tpu.dimension_semantics<parallel>, #tpu.dimension_semantics<arbitrary>], iteration_bounds = array<i64: 1, 3>, scalar_prefetch = 0 : i64, scratch_operands = 2 : i64, tpu.core_type = #tpu.core_type<tc>, window_params = [{transform_indices = @transform_0, window_bounds = array<i64: 16, 256>}, {transform_indices = @transform_1, window_bounds = array<i64: 16, 256>}, {transform_indices = @transform_2, window_bounds = array<i64: 256, 512>}, {transform_indices = @transform_3, window_bounds = array<i64: 256, 512>}, {pipeline_mode = #tpu.pipeline_mode<synchronous>, transform_indices = @transform_4, window_bounds = array<i64: 512, 512>}, {pipeline_mode = #tpu.pipeline_mode<synchronous>, transform_indices = @transform_5, window_bounds = array<i64: 1, 512>}, {pipeline_mode = #tpu.pipeline_mode<synchronous>, transform_indices = @transform_6, window_bounds = array<i64: 1, 512>}, {transform_indices = @transform_7, window_bounds = array<i64: 16, 512>}, {transform_indices = @transform_8, window_bounds = array<i64: 16, 512>}]} {
    %c0_i32 = arith.constant 0 : i32
    %0 = arith.cmpi eq, %arg1, %c0_i32 : i32
    %1 = arith.extui %0 : i1 to i32
    %c0_i32_0 = arith.constant 0 : i32
    %2 = arith.cmpi ne, %1, %c0_i32_0 : i32
    scf.if %2 {
      %cst_18 = arith.constant 0.000000e+00 : f32
      %18 = vector.broadcast %cst_18 : f32 to vector<16x512xf32>
      %c0_19 = arith.constant 0 : index
      %c0_20 = arith.constant 0 : index
      %19 = vector.load %arg11[%c0_19, %c0_20] : memref<16x512xf32, #tpu.memory_space<vmem>>, vector<16x512xf32>
      tpu.vector_store %arg11[%c0_19, %c0_20], %18 {strides = array<i32>} : memref<16x512xf32, #tpu.memory_space<vmem>>, vector<16x512xf32>,
      %cst_21 = arith.constant 0.000000e+00 : f32
      %20 = vector.broadcast %cst_21 : f32 to vector<16x512xf32>
      %c0_22 = arith.constant 0 : index
      %c0_23 = arith.constant 0 : index
      %21 = vector.load %arg12[%c0_22, %c0_23] : memref<16x512xf32, #tpu.memory_space<vmem>>, vector<16x512xf32>
      tpu.vector_store %arg12[%c0_22, %c0_23], %20 {strides = array<i32>} : memref<16x512xf32, #tpu.memory_space<vmem>>, vector<16x512xf32>,
    } else {
    }
    %c0 = arith.constant 0 : index
    %c0_1 = arith.constant 0 : index
    %3 = vector.load %arg11[%c0, %c0_1] : memref<16x512xf32, #tpu.memory_space<vmem>>, vector<16x512xf32>
    %c0_2 = arith.constant 0 : index
    %c0_3 = arith.constant 0 : index
    %4 = vector.load %arg2[%c0_2, %c0_3] : memref<16x256xbf16, #tpu.memory_space<vmem>>, vector<16x256xbf16>
    %c0_4 = arith.constant 0 : index
    %c0_5 = arith.constant 0 : index
    %5 = vector.load %arg4[%c0_4, %c0_5] : memref<256x512xbf16, #tpu.memory_space<vmem>>, vector<256x512xbf16>
    %cst = arith.constant dense<0.000000e+00> : vector<16x512xf32>
    %6 = tpu.matmul %4, %5, %cst {dimension_numbers = #tpu.dot_dimension_numbers<[1], [0], [0], [1], [0, 0, 1, 1], [], []>} : vector<16x256xbf16>, vector<256x512xbf16>, vector<16x512xf32> -> vector<16x512xf32>
    %7 = arith.addf %3, %6 : vector<16x512xf32>
    %c0_6 = arith.constant 0 : index
    %c0_7 = arith.constant 0 : index
    %8 = vector.load %arg11[%c0_6, %c0_7] : memref<16x512xf32, #tpu.memory_space<vmem>>, vector<16x512xf32>
    tpu.vector_store %arg11[%c0_6, %c0_7], %7 {strides = array<i32>} : memref<16x512xf32, #tpu.memory_space<vmem>>, vector<16x512xf32>,
    %c0_8 = arith.constant 0 : index
    %c0_9 = arith.constant 0 : index
    %9 = vector.load %arg12[%c0_8, %c0_9] : memref<16x512xf32, #tpu.memory_space<vmem>>, vector<16x512xf32>
    %c0_10 = arith.constant 0 : index
    %c0_11 = arith.constant 0 : index
    %10 = vector.load %arg3[%c0_10, %c0_11] : memref<16x256xbf16, #tpu.memory_space<vmem>>, vector<16x256xbf16>
    %c0_12 = arith.constant 0 : index
    %c0_13 = arith.constant 0 : index
    %11 = vector.load %arg5[%c0_12, %c0_13] : memref<256x512xbf16, #tpu.memory_space<vmem>>, vector<256x512xbf16>
    %cst_14 = arith.constant dense<0.000000e+00> : vector<16x512xf32>
    %12 = tpu.matmul %10, %11, %cst_14 {dimension_numbers = #tpu.dot_dimension_numbers<[1], [0], [0], [1], [0, 0, 1, 1], [], []>} : vector<16x256xbf16>, vector<256x512xbf16>, vector<16x512xf32> -> vector<16x512xf32>
    %13 = arith.addf %9, %12 : vector<16x512xf32>
    %c0_15 = arith.constant 0 : index
    %c0_16 = arith.constant 0 : index
    %14 = vector.load %arg12[%c0_15, %c0_16] : memref<16x512xf32, #tpu.memory_space<vmem>>, vector<16x512xf32>
    tpu.vector_store %arg12[%c0_15, %c0_16], %13 {strides = array<i32>} : memref<16x512xf32, #tpu.memory_space<vmem>>, vector<16x512xf32>,
    %c2_i32 = arith.constant 2 : i32
    %15 = arith.cmpi eq, %arg1, %c2_i32 : i32
    %16 = arith.extui %15 : i1 to i32
    %c0_i32_17 = arith.constant 0 : i32
    %17 = arith.cmpi ne, %16, %c0_i32_17 : i32
    scf.if %17 {
      %c0_18 = arith.constant 0 : index
      %c0_19 = arith.constant 0 : index
      %18 = vector.load %arg11[%c0_18, %c0_19] : memref<16x512xf32, #tpu.memory_space<vmem>>, vector<16x512xf32>
      %c0_20 = arith.constant 0 : index
      %c0_21 = arith.constant 0 : index
      %19 = vector.load %arg7[%c0_20, %c0_21] : memref<1x512xf32, #tpu.memory_space<vmem>>, vector<1x512xf32>
      %20 = vector.broadcast %19 : vector<1x512xf32> to vector<16x512xf32>
      %21 = arith.addf %18, %20 : vector<16x512xf32>
      %c0_22 = arith.constant 0 : index
      %c0_23 = arith.constant 0 : index
      %22 = vector.load %arg12[%c0_22, %c0_23] : memref<16x512xf32, #tpu.memory_space<vmem>>, vector<16x512xf32>
      %23 = arith.truncf %21 : vector<16x512xf32> to vector<16x512xbf16>
      %c0_24 = arith.constant 0 : index
      %c0_25 = arith.constant 0 : index
      %24 = vector.load %arg6[%c0_24, %c0_25] : memref<512x512xbf16, #tpu.memory_space<vmem>>, vector<512x512xbf16>
      %cst_26 = arith.constant dense<0.000000e+00> : vector<16x512xf32>
      %25 = tpu.matmul %23, %24, %cst_26 {dimension_numbers = #tpu.dot_dimension_numbers<[1], [0], [0], [1], [0, 0, 1, 1], [], []>} : vector<16x512xbf16>, vector<512x512xbf16>, vector<16x512xf32> -> vector<16x512xf32>
      %26 = arith.addf %22, %25 : vector<16x512xf32>
      %c0_27 = arith.constant 0 : index
      %c0_28 = arith.constant 0 : index
      %27 = vector.load %arg8[%c0_27, %c0_28] : memref<1x512xf32, #tpu.memory_space<vmem>>, vector<1x512xf32>
      %28 = vector.broadcast %27 : vector<1x512xf32> to vector<16x512xf32>
      %29 = arith.addf %26, %28 : vector<16x512xf32>
      %c0_29 = arith.constant 0 : index
      %c0_30 = arith.constant 0 : index
      %30 = vector.load %arg10[%c0_29, %c0_30] : memref<16x512xf32, #tpu.memory_space<vmem>>, vector<16x512xf32>
      tpu.vector_store %arg10[%c0_29, %c0_30], %21 {strides = array<i32>} : memref<16x512xf32, #tpu.memory_space<vmem>>, vector<16x512xf32>,
      %c0_31 = arith.constant 0 : index
      %c0_32 = arith.constant 0 : index
      %31 = vector.load %arg9[%c0_31, %c0_32] : memref<16x512xf32, #tpu.memory_space<vmem>>, vector<16x512xf32>
      tpu.vector_store %arg9[%c0_31, %c0_32], %29 {strides = array<i32>} : memref<16x512xf32, #tpu.memory_space<vmem>>, vector<16x512xf32>,
    } else {
    }
    return
  }
  func.func @transform_0(%arg0: i32, %arg1: i32) -> (i32, i32) {
    %c0_i32 = arith.constant 0 : i32
    return %arg0, %arg1 : i32, i32
  }
  func.func @transform_1(%arg0: i32, %arg1: i32) -> (i32, i32) {
    %c0_i32 = arith.constant 0 : i32
    return %arg0, %arg1 : i32, i32
  }
  func.func @transform_2(%arg0: i32, %arg1: i32) -> (i32, i32) {
    %c0_i32 = arith.constant 0 : i32
    %c0_i32_0 = arith.constant 0 : i32
    return %arg1, %c0_i32 : i32, i32
  }
  func.func @transform_3(%arg0: i32, %arg1: i32) -> (i32, i32) {
    %c0_i32 = arith.constant 0 : i32
    %c0_i32_0 = arith.constant 0 : i32
    return %arg1, %c0_i32 : i32, i32
  }
  func.func @transform_4(%arg0: i32, %arg1: i32) -> (i32, i32) {
    %c0_i32 = arith.constant 0 : i32
    %c0_i32_0 = arith.constant 0 : i32
    %c0_i32_1 = arith.constant 0 : i32
    return %c0_i32, %c0_i32_0 : i32, i32
  }
  func.func @transform_5(%arg0: i32, %arg1: i32) -> (i32, i32) {
    %c0_i32 = arith.constant 0 : i32
    %c0_i32_0 = arith.constant 0 : i32
    %c0_i32_1 = arith.constant 0 : i32
    return %c0_i32, %c0_i32_0 : i32, i32
  }
  func.func @transform_6(%arg0: i32, %arg1: i32) -> (i32, i32) {
    %c0_i32 = arith.constant 0 : i32
    %c0_i32_0 = arith.constant 0 : i32
    %c0_i32_1 = arith.constant 0 : i32
    return %c0_i32, %c0_i32_0 : i32, i32
  }
  func.func @transform_7(%arg0: i32, %arg1: i32) -> (i32, i32) {
    %c0_i32 = arith.constant 0 : i32
    %c0_i32_0 = arith.constant 0 : i32
    return %arg0, %c0_i32 : i32, i32
  }
  func.func @transform_8(%arg0: i32, %arg1: i32) -> (i32, i32) {
    %c0_i32 = arith.constant 0 : i32
    %c0_i32_0 = arith.constant 0 : i32
    return %arg0, %c0_i32 : i32, i32
  }
}

</mosaic_0001>

<llo_original>
// kernel: tpu_custom_call.1
$region0: #{tpu_custom_call.1}
  #allocation0 [shape = 'u32[]', space=smem, size = 0x4, offset = 0x4, fixed_abs, tag = 'smem constant byte address 0x4 - core index']
  #allocation1 [shape = 'u32[144,128]{1,0:T(1,128)}', space=vmem, size = 0x12000, scoped, tag = 'internal scratch']
  #allocation2 [shape = 'f32[16,512]{1,0:T(8,128)}', space=vmem, size = 0x8000, scoped, tag = 'scratch operand']
  #allocation3 [shape = 'f32[16,512]{1,0:T(8,128)}', space=vmem, size = 0x8000, scoped, tag = 'scratch operand']
  %s0 = inlined_call_operand.hbm [shape: bf16[16,768], index: 0, kind: input, shape index: {}]
  %s1 = inlined_call_operand.hbm [shape: bf16[16,768], index: 1, kind: input, shape index: {}]
  %s2 = inlined_call_operand.hbm [shape: bf16[768,512], index: 2, kind: input, shape index: {}]
  %s3 = inlined_call_operand.hbm [shape: bf16[768,512], index: 3, kind: input, shape index: {}]
  %s4 = inlined_call_operand.hbm [shape: bf16[512,512], index: 4, kind: input, shape index: {}]
  %s5 = inlined_call_operand.vmem [shape: f32[1,512], index: 5, kind: input, shape index: {}]
  %s6 = inlined_call_operand.vmem [shape: f32[1,512], index: 6, kind: input, shape index: {}]
  %s7 = inlined_call_operand.hbm [shape: f32[16,512], index: 7, kind: output, shape index: {0}]
  %s8 = inlined_call_operand.hbm [shape: f32[16,512], index: 8, kind: output, shape index: {1}]
  %9 = xla_tuple %s7, %s8
  %s10 = sld [smem:[#allocation0]]
  $region97: #{tpu_custom_call.1} parent=0
    _
  %s12 = ssub.s32 1, %s10
  %s13 = scalar_select 0, %s12, %s10
  $region1: #{tpu_custom_call.1} parent=0
    #allocation4 [shape = 'u8[16384]{0}', space=vmem, size = 0x4000, scoped, tag = 'input window, operand 0']
    #allocation5 [shape = 's32[2]{0}', space=sflag, size = 0x8, scoped, tag = 'scoped memory for tpu_custom_call.1']
    #allocation6 [shape = 's32[2]{0}', space=sflag, size = 0x8, scoped, tag = 'scoped memory for tpu_custom_call.1']
    #allocation7 [shape = 'u8[16384]{0}', space=vmem, size = 0x4000, scoped, tag = 'input window, operand 1']
    #allocation8 [shape = 's32[2]{0}', space=sflag, size = 0x8, scoped, tag = 'scoped memory for tpu_custom_call.1']
    #allocation9 [shape = 'u8[524288]{0}', space=vmem, size = 0x80000, scoped, tag = 'input window, operand 2']
    #allocation10 [shape = 'u8[524288]{0}', space=vmem, size = 0x80000, scoped, tag = 'input window, operand 3']
    #allocation11 [shape = 's32[2]{0}', space=sflag, size = 0x8, scoped, tag = 'scoped memory for tpu_custom_call.1']
    #allocation12 [shape = 'u8[524288]{0}', space=vmem, size = 0x80000, scoped, tag = 'input window, operand 4, single buffered']
    #allocation13 [shape = 'u8[32768]{0}', space=vmem, size = 0x8000, scoped, tag = 'output window, operand 0, single buffered']
    #allocation14 [shape = 'u8[32768]{0}', space=vmem, size = 0x8000, scoped, tag = 'output window, operand 1, single buffered']
    #allocation15 [shape = 's32[1]{0}', space=sflag, size = 0x4, scoped, tag = 'scoped memory for tpu_custom_call.1']
    %14 = vsyncpa [#allocation5], 0
    %s15 = scalar_lea.sflag [#allocation5], 1
    %16 = vsyncpa %s15, 0
    %17 = vsyncpa [#allocation8], 0
    %s18 = scalar_lea.sflag [#allocation8], 1
    %19 = vsyncpa %s18, 0
    %20 = vsyncpa [#allocation11], 0
    %s21 = scalar_lea.sflag [#allocation11], 1
    %22 = vsyncpa %s21, 0
    %23 = vsyncpa [#allocation6], 0
    %24 = vsyncpa [#allocation15], 0
    loop: start=0, step=1, limit=5
    $region2: #{tpu_custom_call.1} parent=1 // loop_pre_header
      _
    $region3: #{tpu_custom_call.1} parent=1 // loop_header
      %s26 = sphi 0, %s30
      %p27 = scmp.ge.s32.totalorder %s26, 5
      %s33 = sphi 0, %s45
      %s34 = sphi 0, %s41
      %s35 = sphi 0, %s33
      %s36 = sphi 0, %s34
      %s37 = sphi 0, %s35
      %s38 = sphi 0, %s36
      %s50 = sphi 0, %s52
      %s53 = sphi 0, %s50
      %s54 = sphi 0, %s53
      %s70 = sphi 0, %s54
      %s78 = sphi 0, %s80
      %s81 = sphi 0, %s78
      %s82 = sphi 0, %s81
      %s98 = sphi 0, %s82
      %s104 = sphi 0, %s106
      %s107 = sphi 0, %s104
      %s108 = sphi 0, %s107
      %s124 = sphi 0, %s108
      %s130 = sphi 0, %s132
      %s133 = sphi 0, %s130
      %s134 = sphi 0, %s133
      %s150 = sphi 0, %s134
      %s154 = sphi 0, %s154
      %s156 = sphi 0, %s154
      %s157 = sphi 0, %s156
      %s171 = sphi 0, %s157
      %s175 = sphi 0, %s175
      %s177 = sphi 0, %s175
      %s178 = sphi 0, %s177
      %s192 = sphi 0, %s178
      %s196 = sphi 0, %s196
      %s198 = sphi 0, %s196
      %s199 = sphi 0, %s198
      %s213 = sphi 0, %s199
      %s219 = sphi 0, %s221
      %s222 = sphi 0, %s219
      %s223 = sphi 0, %s222
      %s239 = sphi 0, %s223
      %s245 = sphi 0, %s247
      %s248 = sphi 0, %s245
      %s249 = sphi 0, %s248
      %s265 = sphi 0, %s249
    $region4: #{tpu_custom_call.1} parent=1 // loop_header_branch
      %29 = sbr.rel (%p27) target = $region8
    $region5: #{tpu_custom_call.1} parent=1 // loop_body
      %s31 = ssub.s32 %s26, 1
      %s32 = ssub.s32 %s26, 2
      %s39 = sadd.s32 1, %s34
      %p40 = scmp.ge.s32.totalorder %s39, 3
      %s41 = scalar_select %p40, 0, %s39
      %s42 = sadd.s32 1, %s33
      %s43 = scalar_select %p40, %s42, %s33
      %p44 = scmp.ge.s32.totalorder %s43, 1
      %s45 = scalar_select %p44, 0, %s43
      %s46 = ssub.s32 %s33, %s45
      %s47 = ssub.s32 %s34, %s41
      %s48 = sor.u32 %s46, %s47
      %p49 = scmp.eq.s32.totalorder %s48, 0
      %s51 = sadd.s32 %s50, 1
      %s52 = scalar_select %p49, %s50, %s51
      %p55 = pneg %p49
      %p56 = scmp.eq.s32.totalorder %s26, 2
      %p57 = por %p55, %p56
      %p58 = scmp.ne.s32.totalorder %s50, %s53
      %p59 = scmp.eq.s32.totalorder %s26, 0
      %p60 = por %p58, %p59
      %p61 = scmp.ne.s32.totalorder %s50, %s53
      %p62 = scmp.eq.s32.totalorder %s31, 2
      %p63 = por %p61, %p62
      %p64 = scmp.ne.s32.totalorder %s53, %s54
      %p65 = scmp.eq.s32.totalorder %s31, 0
      %p66 = por %p64, %p65
      %p67 = scmp.ne.s32.totalorder %s53, %s54
      %p68 = scmp.eq.s32.totalorder %s32, 2
      %p69 = por %p67, %p68
      %p71 = scmp.ne.s32.totalorder %s54, %s70
      %p72 = scmp.eq.s32.totalorder %s32, 0
      %p73 = por %p71, %p72
      %s74 = ssub.s32 %s33, %s45
      %s75 = ssub.s32 %s34, %s41
      %s76 = sor.u32 %s74, %s75
      %p77 = scmp.eq.s32.totalorder %s76, 0
      %s79 = sadd.s32 %s78, 1
      %s80 = scalar_select %p77, %s78, %s79
      %p83 = pneg %p77
      %p84 = scmp.eq.s32.totalorder %s26, 2
      %p85 = por %p83, %p84
      %p86 = scmp.ne.s32.totalorder %s78, %s81
      %p87 = scmp.eq.s32.totalorder %s26, 0
      %p88 = por %p86, %p87
      %p89 = scmp.ne.s32.totalorder %s78, %s81
      %p90 = scmp.eq.s32.totalorder %s31, 2
      %p91 = por %p89, %p90
      %p92 = scmp.ne.s32.totalorder %s81, %s82
      %p93 = scmp.eq.s32.totalorder %s31, 0
      %p94 = por %p92, %p93
      %p95 = scmp.ne.s32.totalorder %s81, %s82
      %p96 = scmp.eq.s32.totalorder %s32, 2
      %p97 = por %p95, %p96
      %p99 = scmp.ne.s32.totalorder %s82, %s98
      %p100 = scmp.eq.s32.totalorder %s32, 0
      %p101 = por %p99, %p100
      %s102 = ssub.s32 %s34, %s41
      %p103 = scmp.eq.s32.totalorder %s102, 0
      %s105 = sadd.s32 %s104, 1
      %s106 = scalar_select %p103, %s104, %s105
      %p109 = pneg %p103
      %p110 = scmp.eq.s32.totalorder %s26, 2
      %p111 = por %p109, %p110
      %p112 = scmp.ne.s32.totalorder %s104, %s107
      %p113 = scmp.eq.s32.totalorder %s26, 0
      %p114 = por %p112, %p113
      %p115 = scmp.ne.s32.totalorder %s104, %s107
      %p116 = scmp.eq.s32.totalorder %s31, 2
      %p117 = por %p115, %p116
      %p118 = scmp.ne.s32.totalorder %s107, %s108
      %p119 = scmp.eq.s32.totalorder %s31, 0
      %p120 = por %p118, %p119
      %p121 = scmp.ne.s32.totalorder %s107, %s108
      %p122 = scmp.eq.s32.totalorder %s32, 2
      %p123 = por %p121, %p122
      %p125 = scmp.ne.s32.totalorder %s108, %s124
      %p126 = scmp.eq.s32.totalorder %s32, 0
      %p127 = por %p125, %p126
      %s128 = ssub.s32 %s34, %s41
      %p129 = scmp.eq.s32.totalorder %s128, 0
      %s131 = sadd.s32 %s130, 1
      %s132 = scalar_select %p129, %s130, %s131
      %p135 = pneg %p129
      %p136 = scmp.eq.s32.totalorder %s26, 2
      %p137 = por %p135, %p136
      %p138 = scmp.ne.s32.totalorder %s130, %s133
      %p139 = scmp.eq.s32.totalorder %s26, 0
      %p140 = por %p138, %p139
      %p141 = scmp.ne.s32.totalorder %s130, %s133
      %p142 = scmp.eq.s32.totalorder %s31, 2
      %p143 = por %p141, %p142
      %p144 = scmp.ne.s32.totalorder %s133, %s134
      %p145 = scmp.eq.s32.totalorder %s31, 0
      %p146 = por %p144, %p145
      %p147 = scmp.ne.s32.totalorder %s133, %s134
      %p148 = scmp.eq.s32.totalorder %s32, 2
      %p149 = por %p147, %p148
      %p151 = scmp.ne.s32.totalorder %s134, %s150
      %p152 = scmp.eq.s32.totalorder %s32, 0
      %p153 = por %p151, %p152
      %s155 = sadd.s32 %s154, 1
      %p158 = scmp.eq.s32.totalorder %s26, 2
      %p159 = scmp.ne.s32.totalorder %s154, %s156
      %p160 = scmp.eq.s32.totalorder %s26, 0
      %p161 = por %p159, %p160
      %p162 = scmp.ne.s32.totalorder %s154, %s156
      %p163 = scmp.eq.s32.totalorder %s31, 2
      %p164 = por %p162, %p163
      %p165 = scmp.ne.s32.totalorder %s156, %s157
      %p166 = scmp.eq.s32.totalorder %s31, 0
      %p167 = por %p165, %p166
      %p168 = scmp.ne.s32.totalorder %s156, %s157
      %p169 = scmp.eq.s32.totalorder %s32, 2
      %p170 = por %p168, %p169
      %p172 = scmp.ne.s32.totalorder %s157, %s171
      %p173 = scmp.eq.s32.totalorder %s32, 0
      %p174 = por %p172, %p173
      %s176 = sadd.s32 %s175, 1
      %p179 = scmp.eq.s32.totalorder %s26, 2
      %p180 = scmp.ne.s32.totalorder %s175, %s177
      %p181 = scmp.eq.s32.totalorder %s26, 0
      %p182 = por %p180, %p181
      %p183 = scmp.ne.s32.totalorder %s175, %s177
      %p184 = scmp.eq.s32.totalorder %s31, 2
      %p185 = por %p183, %p184
      %p186 = scmp.ne.s32.totalorder %s177, %s178
      %p187 = scmp.eq.s32.totalorder %s31, 0
      %p188 = por %p186, %p187
      %p189 = scmp.ne.s32.totalorder %s177, %s178
      %p190 = scmp.eq.s32.totalorder %s32, 2
      %p191 = por %p189, %p190
      %p193 = scmp.ne.s32.totalorder %s178, %s192
      %p194 = scmp.eq.s32.totalorder %s32, 0
      %p195 = por %p193, %p194
      %s197 = sadd.s32 %s196, 1
      %p200 = scmp.eq.s32.totalorder %s26, 2
      %p201 = scmp.ne.s32.totalorder %s196, %s198
      %p202 = scmp.eq.s32.totalorder %s26, 0
      %p203 = por %p201, %p202
      %p204 = scmp.ne.s32.totalorder %s196, %s198
      %p205 = scmp.eq.s32.totalorder %s31, 2
      %p206 = por %p204, %p205
      %p207 = scmp.ne.s32.totalorder %s198, %s199
      %p208 = scmp.eq.s32.totalorder %s31, 0
      %p209 = por %p207, %p208
      %p210 = scmp.ne.s32.totalorder %s198, %s199
      %p211 = scmp.eq.s32.totalorder %s32, 2
      %p212 = por %p210, %p211
      %p214 = scmp.ne.s32.totalorder %s199, %s213
      %p215 = scmp.eq.s32.totalorder %s32, 0
      %p216 = por %p214, %p215
      %s217 = ssub.s32 %s33, %s45
      %p218 = scmp.eq.s32.totalorder %s217, 0
      %s220 = sadd.s32 %s219, 1
      %s221 = scalar_select %p218, %s219, %s220
      %p224 = pneg %p218
      %p225 = scmp.eq.s32.totalorder %s26, 2
      %p226 = por %p224, %p225
      %p227 = scmp.ne.s32.totalorder %s219, %s222
      %p228 = scmp.eq.s32.totalorder %s26, 0
      %p229 = por %p227, %p228
      %p230 = scmp.ne.s32.totalorder %s219, %s222
      %p231 = scmp.eq.s32.totalorder %s31, 2
      %p232 = por %p230, %p231
      %p233 = scmp.ne.s32.totalorder %s222, %s223
      %p234 = scmp.eq.s32.totalorder %s31, 0
      %p235 = por %p233, %p234
      %p236 = scmp.ne.s32.totalorder %s222, %s223
      %p237 = scmp.eq.s32.totalorder %s32, 2
      %p238 = por %p236, %p237
      %p240 = scmp.ne.s32.totalorder %s223, %s239
      %p241 = scmp.eq.s32.totalorder %s32, 0
      %p242 = por %p240, %p241
      %s243 = ssub.s32 %s33, %s45
      %p244 = scmp.eq.s32.totalorder %s243, 0
      %s246 = sadd.s32 %s245, 1
      %s247 = scalar_select %p244, %s245, %s246
      %p250 = pneg %p244
      %p251 = scmp.eq.s32.totalorder %s26, 2
      %p252 = por %p250, %p251
      %p253 = scmp.ne.s32.totalorder %s245, %s248
      %p254 = scmp.eq.s32.totalorder %s26, 0
      %p255 = por %p253, %p254
      %p256 = scmp.ne.s32.totalorder %s245, %s248
      %p257 = scmp.eq.s32.totalorder %s31, 2
      %p258 = por %p256, %p257
      %p259 = scmp.ne.s32.totalorder %s248, %s249
      %p260 = scmp.eq.s32.totalorder %s31, 0
      %p261 = por %p259, %p260
      %p262 = scmp.ne.s32.totalorder %s248, %s249
      %p263 = scmp.eq.s32.totalorder %s32, 2
      %p264 = por %p262, %p263
      %p266 = scmp.ne.s32.totalorder %s249, %s265
      %p267 = scmp.eq.s32.totalorder %s32, 0
      %p268 = por %p266, %p267
      %p269 = scmp.le.s32.totalorder 1, %s26
      %p270 = scmp.lt.s32.totalorder %s26, 4
      %p271 = pnand %p269, %p270
      %p272 = pneg %p271
      // Predicated region
      $region9: #{tpu_custom_call.1} parent=5 // pred_check
        _
      $region10: #{tpu_custom_call.1} parent=5 // pred_check_branch
        %274 = sbr.rel (%p271) target = $region12
      $region11: #{tpu_custom_call.1} parent=5 // pred_region
        %s275 = ssub.s32 %s26, 1
        // Predicated region
        $region13: #{tpu_custom_call.1} parent=11 // pred_check
          %p276 = pneg %p167
        $region14: #{tpu_custom_call.1} parent=11 // pred_check_branch
          %278 = sbr.rel (%p276) target = $region16
        $region15: #{tpu_custom_call.1} parent=11 // pred_region
          %s280 = ssub.s32 16384, 16384
          %281 = vsyncadd [#allocation11], %s280
          %s282 = sshll.u32 [#allocation12], 4
          %s283 = int_to_ptr.vmem [resolvable:$true] %s282
          %288 = dma.hbm_to_vmem [thread:$0]  %s4, 16384, %s283, [#allocation11], 256, 256, 16
        $region16: #{tpu_custom_call.1} parent=11 // pred_fallthru
          _
        // Predicated region
        $region17: #{tpu_custom_call.1} parent=11 // pred_check
          %p289 = pneg %p188
        $region18: #{tpu_custom_call.1} parent=11 // pred_check_branch
          %291 = sbr.rel (%p289) target = $region20
        $region19: #{tpu_custom_call.1} parent=11 // pred_region
          _
        $region20: #{tpu_custom_call.1} parent=11 // pred_fallthru
          _
        // Predicated region
        $region21: #{tpu_custom_call.1} parent=11 // pred_check
          %p292 = pneg %p209
        $region22: #{tpu_custom_call.1} parent=11 // pred_check_branch
          %294 = sbr.rel (%p292) target = $region24
        $region23: #{tpu_custom_call.1} parent=11 // pred_region
          _
        $region24: #{tpu_custom_call.1} parent=11 // pred_fallthru
          _
      $region12: #{tpu_custom_call.1} parent=5 // pred_fallthru
        _
      %p295 = scmp.lt.s32.totalorder %s26, 3
      // Predicated region
      $region25: #{tpu_custom_call.1} parent=5 // pred_check
        %p296 = pneg %p295
      $region26: #{tpu_custom_call.1} parent=5 // pred_check_branch
        %298 = sbr.rel (%p296) target = $region28
      $region27: #{tpu_custom_call.1} parent=5 // pred_region
        // Predicated region
        $region29: #{tpu_custom_call.1} parent=27 // pred_check
          %p299 = pneg %p60
        $region30: #{tpu_custom_call.1} parent=27 // pred_check_branch
          %301 = sbr.rel (%p299) target = $region32
        $region31: #{tpu_custom_call.1} parent=27 // pred_region
          %s302 = sand.u32 %s50, 1
          %s303 = scalar_lea.sflag [#allocation5], %s302
          %s304 = sand.u32 %s50, 1
          %s305 = smul.addr %s304, 16
          %s306 = scalar_lea.vmem [#allocation4], %s305
          %s307 = smul.u32 2, %s33
          %s308 = smul.u32 2, %s34
          %s310 = ssub.s32 256, 256
          %311 = vsyncadd %s303, %s310
          %s312 = smul.addr %s307, 6
          %s313 = sadd.s32 %s308, %s312
          %s314 = smul.addr %s313, 64
          %s315 = scalar_lea.hbm %s0, %s314
          %s316 = sshll.u32 %s306, 4
          %s317 = int_to_ptr.vmem [resolvable:$true] %s316
          %322 = dma.hbm_to_vmem [thread:$0]  %s315, 256, %s317, %s303, 384, 128, 8
        $region32: #{tpu_custom_call.1} parent=27 // pred_fallthru
          _
        // Predicated region
        $region33: #{tpu_custom_call.1} parent=27 // pred_check
          %p323 = pneg %p88
        $region34: #{tpu_custom_call.1} parent=27 // pred_check_branch
          %325 = sbr.rel (%p323) target = $region36
        $region35: #{tpu_custom_call.1} parent=27 // pred_region
          %s326 = sand.u32 %s26, 1
          %s327 = scalar_lea.sflag [#allocation8], %s326
          %s328 = sand.u32 %s78, 1
          %s329 = smul.addr %s328, 16
          %s330 = scalar_lea.vmem [#allocation7], %s329
          %s331 = smul.u32 2, %s33
          %s332 = smul.u32 2, %s34
          %s334 = ssub.s32 256, 256
          %335 = vsyncadd %s327, %s334
          %s336 = smul.addr %s331, 6
          %s337 = sadd.s32 %s332, %s336
          %s338 = smul.addr %s337, 64
          %s339 = scalar_lea.hbm %s1, %s338
          %s340 = sshll.u32 %s330, 4
          %s341 = int_to_ptr.vmem [resolvable:$true] %s340
          %346 = dma.hbm_to_vmem [thread:$0]  %s339, 256, %s341, %s327, 384, 128, 8
        $region36: #{tpu_custom_call.1} parent=27 // pred_fallthru
          _
        // Predicated region
        $region37: #{tpu_custom_call.1} parent=27 // pred_check
          %p347 = pneg %p114
        $region38: #{tpu_custom_call.1} parent=27 // pred_check_branch
          %349 = sbr.rel (%p347) target = $region40
        $region39: #{tpu_custom_call.1} parent=27 // pred_region
          %s350 = sand.u32 %s26, 1
          %s351 = scalar_lea.sflag [#allocation8], %s350
          %s352 = sand.u32 %s104, 1
          %s353 = smul.addr %s352, 512
          %s354 = scalar_lea.vmem [#allocation9], %s353
          %s355 = smul.u32 32, %s34
          %s357 = ssub.s32 8192, 8192
          %358 = vsyncadd %s351, %s357
          %s359 = smul.addr %s355, 4
          %s360 = smul.addr %s359, 64
          %s361 = scalar_lea.hbm %s2, %s360
          %s362 = sshll.u32 %s354, 4
          %s363 = int_to_ptr.vmem [resolvable:$true] %s362
          %368 = dma.hbm_to_vmem [thread:$0]  %s361, 8192, %s363, %s351, 256, 256, 16
        $region40: #{tpu_custom_call.1} parent=27 // pred_fallthru
          _
        // Predicated region
        $region41: #{tpu_custom_call.1} parent=27 // pred_check
          %p369 = pneg %p140
        $region42: #{tpu_custom_call.1} parent=27 // pred_check_branch
          %371 = sbr.rel (%p369) target = $region44
        $region43: #{tpu_custom_call.1} parent=27 // pred_region
          %s372 = sand.u32 %s26, 1
          %s373 = scalar_lea.sflag [#allocation11], %s372
          %s374 = sand.u32 %s130, 1
          %s375 = smul.addr %s374, 512
          %s376 = scalar_lea.vmem [#allocation10], %s375
          %s377 = smul.u32 32, %s34
          %s379 = ssub.s32 8192, 8192
          %380 = vsyncadd %s373, %s379
          %s381 = smul.addr %s377, 4
          %s382 = smul.addr %s381, 64
          %s383 = scalar_lea.hbm %s3, %s382
          %s384 = sshll.u32 %s376, 4
          %s385 = int_to_ptr.vmem [resolvable:$true] %s384
          %390 = dma.hbm_to_vmem [thread:$0]  %s383, 8192, %s385, %s373, 256, 256, 16
        $region44: #{tpu_custom_call.1} parent=27 // pred_fallthru
          _
      $region28: #{tpu_custom_call.1} parent=5 // pred_fallthru
        _
      %p391 = scmp.le.s32.totalorder 1, %s26
      %p392 = scmp.lt.s32.totalorder %s26, 4
      %p393 = pnand %p391, %p392
      %p394 = pneg %p393
      // Predicated region
      $region45: #{tpu_custom_call.1} parent=5 // pred_check
        _
      $region46: #{tpu_custom_call.1} parent=5 // pred_check_branch
        %396 = sbr.rel (%p393) target = $region48
      $region47: #{tpu_custom_call.1} parent=5 // pred_region
        %s397 = ssub.s32 %s26, 1
        %s398 = sand.u32 %s53, 1
        %s399 = scalar_lea.sflag [#allocation5], %s398
        %s400 = sand.u32 %s53, 1
        %s401 = smul.addr %s400, 16
        %s402 = scalar_lea.vmem [#allocation4], %s401
        // Predicated region
        $region49: #{tpu_custom_call.1} parent=47 // pred_check
          %p403 = pneg %p66
        $region50: #{tpu_custom_call.1} parent=47 // pred_check_branch
          %405 = sbr.rel (%p403) target = $region52
        $region51: #{tpu_custom_call.1} parent=47 // pred_region
          %406 = dma.done %s399, 256
        $region52: #{tpu_custom_call.1} parent=47 // pred_fallthru
          _
        %s407 = sand.u32 %s31, 1
        %s408 = scalar_lea.sflag [#allocation8], %s407
        %s409 = sand.u32 %s81, 1
        %s410 = smul.addr %s409, 16
        %s411 = scalar_lea.vmem [#allocation7], %s410
        // Predicated region
        $region53: #{tpu_custom_call.1} parent=47 // pred_check
          %p412 = pneg %p94
        $region54: #{tpu_custom_call.1} parent=47 // pred_check_branch
          %414 = sbr.rel (%p412) target = $region56
        $region55: #{tpu_custom_call.1} parent=47 // pred_region
          %415 = dma.done %s408, 256
        $region56: #{tpu_custom_call.1} parent=47 // pred_fallthru
          _
        %s416 = sand.u32 %s31, 1
        %s417 = scalar_lea.sflag [#allocation8], %s416
        %s418 = sand.u32 %s107, 1
        %s419 = smul.addr %s418, 512
        %s420 = scalar_lea.vmem [#allocation9], %s419
        // Predicated region
        $region57: #{tpu_custom_call.1} parent=47 // pred_check
          %p421 = pneg %p120
        $region58: #{tpu_custom_call.1} parent=47 // pred_check_branch
          %423 = sbr.rel (%p421) target = $region60
        $region59: #{tpu_custom_call.1} parent=47 // pred_region
          %424 = dma.done %s417, 8192
        $region60: #{tpu_custom_call.1} parent=47 // pred_fallthru
          _
        %s425 = sand.u32 %s31, 1
        %s426 = scalar_lea.sflag [#allocation11], %s425
        %s427 = sand.u32 %s133, 1
        %s428 = smul.addr %s427, 512
        %s429 = scalar_lea.vmem [#allocation10], %s428
        // Predicated region
        $region61: #{tpu_custom_call.1} parent=47 // pred_check
          %p430 = pneg %p146
        $region62: #{tpu_custom_call.1} parent=47 // pred_check_branch
          %432 = sbr.rel (%p430) target = $region64
        $region63: #{tpu_custom_call.1} parent=47 // pred_region
          %433 = dma.done %s426, 8192
        $region64: #{tpu_custom_call.1} parent=47 // pred_fallthru
          _
        // Predicated region
        $region65: #{tpu_custom_call.1} parent=47 // pred_check
          %p434 = pneg %p167
        $region66: #{tpu_custom_call.1} parent=47 // pred_check_branch
          %436 = sbr.rel (%p434) target = $region68
        $region67: #{tpu_custom_call.1} parent=47 // pred_region
          %437 = dma.done [#allocation11], 16384
        $region68: #{tpu_custom_call.1} parent=47 // pred_fallthru
          _
        %s438 = sand.u32 %s53, 1
        %s439 = scalar_lea.sflag [#allocation5], %s438
        %s440 = sand.u32 %s53, 1
        %s441 = smul.addr %s440, 16
        %s442 = scalar_lea.vmem [#allocation4], %s441
        %p443 = pneg %p66
        %p444 = pneg %p63
        %s445 = sand.u32 %s31, 1
        %s446 = scalar_lea.sflag [#allocation8], %s445
        %s447 = sand.u32 %s81, 1
        %s448 = smul.addr %s447, 16
        %s449 = scalar_lea.vmem [#allocation7], %s448
        %p450 = pneg %p94
        %p451 = pneg %p91
        %s452 = sand.u32 %s31, 1
        %s453 = scalar_lea.sflag [#allocation8], %s452
        %s454 = sand.u32 %s107, 1
        %s455 = smul.addr %s454, 512
        %s456 = scalar_lea.vmem [#allocation9], %s455
        %p457 = pneg %p120
        %p458 = pneg %p117
        %s459 = sand.u32 %s31, 1
        %s460 = scalar_lea.sflag [#allocation11], %s459
        %s461 = sand.u32 %s133, 1
        %s462 = smul.addr %s461, 512
        %s463 = scalar_lea.vmem [#allocation10], %s462
        %p464 = pneg %p146
        %p465 = pneg %p143
        %p466 = pneg %p167
        %p467 = pneg %p164
        %p468 = pneg %p188
        %p469 = pneg %p185
        %p470 = pneg %p209
        %p471 = pneg %p206
        %p472 = pneg %p235
        %p473 = pneg %p232
        %p474 = pneg %p261
        %p475 = pneg %p258
        %s476 = smul.u32 2, %s35
        %s477 = smul.u32 2, %s36
        %s478 = smul.u32 2, %s35
        %s479 = smul.u32 2, %s36
        %s480 = smul.u32 32, %s36
        %s481 = smul.u32 32, %s36
        %s482 = smul.u32 2, %s35
        %s483 = smul.u32 2, %s35
        %p484 = scmp.eq.s32.totalorder %s36, 0
        // Predicated region
        $region69: #{tpu_custom_call.1} parent=47 // pred_check
          %p485 = pneg %p484
        $region70: #{tpu_custom_call.1} parent=47 // pred_check_branch
          %487 = sbr.rel (%p485) target = $region72
        $region71: #{tpu_custom_call.1} parent=47 // pred_region
          %488 = vst [vmem:[#allocation2] sm:$0xff] 0.0
          %489 = vst [vmem:[#allocation2 + $0x8] sm:$0xff] 0.0
          %490 = vst [vmem:[#allocation2 + $0x10] sm:$0xff] 0.0
          %491 = vst [vmem:[#allocation2 + $0x18] sm:$0xff] 0.0
          %492 = vst [vmem:[#allocation2 + $0x20] sm:$0xff] 0.0
          %493 = vst [vmem:[#allocation2 + $0x28] sm:$0xff] 0.0
          %494 = vst [vmem:[#allocation2 + $0x30] sm:$0xff] 0.0
          %495 = vst [vmem:[#allocation2 + $0x38] sm:$0xff] 0.0
          %496 = vst [vmem:[#allocation3] sm:$0xff] 0.0
          %497 = vst [vmem:[#allocation3 + $0x8] sm:$0xff] 0.0
          %498 = vst [vmem:[#allocation3 + $0x10] sm:$0xff] 0.0
          %499 = vst [vmem:[#allocation3 + $0x18] sm:$0xff] 0.0
          %500 = vst [vmem:[#allocation3 + $0x20] sm:$0xff] 0.0
          %501 = vst [vmem:[#allocation3 + $0x28] sm:$0xff] 0.0
          %502 = vst [vmem:[#allocation3 + $0x30] sm:$0xff] 0.0
          %503 = vst [vmem:[#allocation3 + $0x38] sm:$0xff] 0.0
        $region72: #{tpu_custom_call.1} parent=47 // pred_fallthru
          _
        %v504 = vld [vmem:[#allocation2] sm:$0xff]
        %v505 = vld [vmem:[#allocation2 + $0x8] sm:$0xff]
        %v506 = vld [vmem:[#allocation2 + $0x10] sm:$0xff]
        %v507 = vld [vmem:[#allocation2 + $0x18] sm:$0xff]
        %v508 = vld [vmem:[#allocation2 + $0x20] sm:$0xff]
        %v509 = vld [vmem:[#allocation2 + $0x28] sm:$0xff]
        %v510 = vld [vmem:[#allocation2 + $0x30] sm:$0xff]
        %v511 = vld [vmem:[#allocation2 + $0x38] sm:$0xff]
        %v512 = vld [vmem:[%s402] sm:$0xff]
        %v513 = vld [vmem:[%s402 + $0x8] sm:$0xff]
        %v514 = vld [vmem:[%s420] sm:$0xff]
        %v515 = vld [vmem:[%s420 + $0x8] sm:$0xff]
        %v516 = vld [vmem:[%s420 + $0x10] sm:$0xff]
        %v517 = vld [vmem:[%s420 + $0x18] sm:$0xff]
        %v518 = vld [vmem:[%s420 + $0x20] sm:$0xff]
        %v519 = vld [vmem:[%s420 + $0x28] sm:$0xff]
        %v520 = vld [vmem:[%s420 + $0x30] sm:$0xff]
        %v521 = vld [vmem:[%s420 + $0x38] sm:$0xff]
        %v522 = vld [vmem:[%s420 + $0x40] sm:$0xff]
        %v523 = vld [vmem:[%s420 + $0x48] sm:$0xff]
        %v524 = vld [vmem:[%s420 + $0x50] sm:$0xff]
        %v525 = vld [vmem:[%s420 + $0x58] sm:$0xff]
        %v526 = vld [vmem:[%s420 + $0x60] sm:$0xff]
        %v527 = vld [vmem:[%s420 + $0x68] sm:$0xff]
        %v528 = vld [vmem:[%s420 + $0x70] sm:$0xff]
        %v529 = vld [vmem:[%s420 + $0x78] sm:$0xff]
        %v530 = vld [vmem:[%s420 + $0x80] sm:$0xff]
        %v531 = vld [vmem:[%s420 + $0x88] sm:$0xff]
        %v532 = vld [vmem:[%s420 + $0x90] sm:$0xff]
        %v533 = vld [vmem:[%s420 + $0x98] sm:$0xff]
        %v534 = vld [vmem:[%s420 + $0xa0] sm:$0xff]
        %v535 = vld [vmem:[%s420 + $0xa8] sm:$0xff]
        %v536 = vld [vmem:[%s420 + $0xb0] sm:$0xff]
        %v537 = vld [vmem:[%s420 + $0xb8] sm:$0xff]
        %v538 = vld [vmem:[%s420 + $0xc0] sm:$0xff]
        %v539 = vld [vmem:[%s420 + $0xc8] sm:$0xff]
        %v540 = vld [vmem:[%s420 + $0xd0] sm:$0xff]
        %v541 = vld [vmem:[%s420 + $0xd8] sm:$0xff]
        %v542 = vld [vmem:[%s420 + $0xe0] sm:$0xff]
        %v543 = vld [vmem:[%s420 + $0xe8] sm:$0xff]
        %v544 = vld [vmem:[%s420 + $0xf0] sm:$0xff]
        %v545 = vld [vmem:[%s420 + $0xf8] sm:$0xff]
        %v546 = vld [vmem:[%s420 + $0x100] sm:$0xff]
        %v547 = vld [vmem:[%s420 + $0x108] sm:$0xff]
        %v548 = vld [vmem:[%s420 + $0x110] sm:$0xff]
        %v549 = vld [vmem:[%s420 + $0x118] sm:$0xff]
        %v550 = vld [vmem:[%s420 + $0x120] sm:$0xff]
        %v551 = vld [vmem:[%s420 + $0x128] sm:$0xff]
        %v552 = vld [vmem:[%s420 + $0x130] sm:$0xff]
        %v553 = vld [vmem:[%s420 + $0x138] sm:$0xff]
        %v554 = vld [vmem:[%s420 + $0x140] sm:$0xff]
        %v555 = vld [vmem:[%s420 + $0x148] sm:$0xff]
        %v556 = vld [vmem:[%s420 + $0x150] sm:$0xff]
        %v557 = vld [vmem:[%s420 + $0x158] sm:$0xff]
        %v558 = vld [vmem:[%s420 + $0x160] sm:$0xff]
        %v559 = vld [vmem:[%s420 + $0x168] sm:$0xff]
        %v560 = vld [vmem:[%s420 + $0x170] sm:$0xff]
        %v561 = vld [vmem:[%s420 + $0x178] sm:$0xff]
        %v562 = vld [vmem:[%s420 + $0x180] sm:$0xff]
        %v563 = vld [vmem:[%s420 + $0x188] sm:$0xff]
        %v564 = vld [vmem:[%s420 + $0x190] sm:$0xff]
        %v565 = vld [vmem:[%s420 + $0x198] sm:$0xff]
        %v566 = vld [vmem:[%s420 + $0x1a0] sm:$0xff]
        %v567 = vld [vmem:[%s420 + $0x1a8] sm:$0xff]
        %v568 = vld [vmem:[%s420 + $0x1b0] sm:$0xff]
        %v569 = vld [vmem:[%s420 + $0x1b8] sm:$0xff]
        %v570 = vld [vmem:[%s420 + $0x1c0] sm:$0xff]
        %v571 = vld [vmem:[%s420 + $0x1c8] sm:$0xff]
        %v572 = vld [vmem:[%s420 + $0x1d0] sm:$0xff]
        %v573 = vld [vmem:[%s420 + $0x1d8] sm:$0xff]
        %v574 = vld [vmem:[%s420 + $0x1e0] sm:$0xff]
        %v575 = vld [vmem:[%s420 + $0x1e8] sm:$0xff]
        %v576 = vld [vmem:[%s420 + $0x1f0] sm:$0xff]
        %v577 = vld [vmem:[%s420 + $0x1f8] sm:$0xff]
        %v580 = vunpack.c.l.b16 %v512
        %v581 = vunpack.c.h.b16 %v512
        %v582 = vunpack.c.l.b16 %v513
        %v583 = vunpack.c.h.b16 %v513
        %v584 = vpack.c.b16 %v582, %v580
        %v585 = vpack.c.b16 %v583, %v581
        %v652 = vunpack.c.l.b16 %v514
        %v653 = vunpack.c.h.b16 %v514
        %v654 = vunpack.c.l.b16 %v515
        %v655 = vunpack.c.h.b16 %v515
        %v656 = vunpack.c.l.b16 %v516
        %v657 = vunpack.c.h.b16 %v516
        %v658 = vunpack.c.l.b16 %v517
        %v659 = vunpack.c.h.b16 %v517
        %v660 = vunpack.c.l.b16 %v518
        %v661 = vunpack.c.h.b16 %v518
        %v662 = vunpack.c.l.b16 %v519
        %v663 = vunpack.c.h.b16 %v519
        %v664 = vunpack.c.l.b16 %v520
        %v665 = vunpack.c.h.b16 %v520
        %v666 = vunpack.c.l.b16 %v521
        %v667 = vunpack.c.h.b16 %v521
        %v668 = vunpack.c.l.b16 %v522
        %v669 = vunpack.c.h.b16 %v522
        %v670 = vunpack.c.l.b16 %v523
        %v671 = vunpack.c.h.b16 %v523
        %v672 = vunpack.c.l.b16 %v524
        %v673 = vunpack.c.h.b16 %v524
        %v674 = vunpack.c.l.b16 %v525
        %v675 = vunpack.c.h.b16 %v525
        %v676 = vunpack.c.l.b16 %v526
        %v677 = vunpack.c.h.b16 %v526
        %v678 = vunpack.c.l.b16 %v527
        %v679 = vunpack.c.h.b16 %v527
        %v680 = vunpack.c.l.b16 %v528
        %v681 = vunpack.c.h.b16 %v528
        %v682 = vunpack.c.l.b16 %v529
        %v683 = vunpack.c.h.b16 %v529
        %v684 = vunpack.c.l.b16 %v530
        %v685 = vunpack.c.h.b16 %v530
        %v686 = vunpack.c.l.b16 %v531
        %v687 = vunpack.c.h.b16 %v531
        %v688 = vunpack.c.l.b16 %v532
        %v689 = vunpack.c.h.b16 %v532
        %v690 = vunpack.c.l.b16 %v533
        %v691 = vunpack.c.h.b16 %v533
        %v692 = vunpack.c.l.b16 %v534
        %v693 = vunpack.c.h.b16 %v534
        %v694 = vunpack.c.l.b16 %v535
        %v695 = vunpack.c.h.b16 %v535
        %v696 = vunpack.c.l.b16 %v536
        %v697 = vunpack.c.h.b16 %v536
        %v698 = vunpack.c.l.b16 %v537
        %v699 = vunpack.c.h.b16 %v537
        %v700 = vunpack.c.l.b16 %v538
        %v701 = vunpack.c.h.b16 %v538
        %v702 = vunpack.c.l.b16 %v539
        %v703 = vunpack.c.h.b16 %v539
        %v704 = vunpack.c.l.b16 %v540
        %v705 = vunpack.c.h.b16 %v540
        %v706 = vunpack.c.l.b16 %v541
        %v707 = vunpack.c.h.b16 %v541
        %v708 = vunpack.c.l.b16 %v542
        %v709 = vunpack.c.h.b16 %v542
        %v710 = vunpack.c.l.b16 %v543
        %v711 = vunpack.c.h.b16 %v543
        %v712 = vunpack.c.l.b16 %v544
        %v713 = vunpack.c.h.b16 %v544
        %v714 = vunpack.c.l.b16 %v545
        %v715 = vunpack.c.h.b16 %v545
        %v716 = vunpack.c.l.b16 %v546
        %v717 = vunpack.c.h.b16 %v546
        %v718 = vunpack.c.l.b16 %v547
        %v719 = vunpack.c.h.b16 %v547
        %v720 = vunpack.c.l.b16 %v548
        %v721 = vunpack.c.h.b16 %v548
        %v722 = vunpack.c.l.b16 %v549
        %v723 = vunpack.c.h.b16 %v549
        %v724 = vunpack.c.l.b16 %v550
        %v725 = vunpack.c.h.b16 %v550
        %v726 = vunpack.c.l.b16 %v551
        %v727 = vunpack.c.h.b16 %v551
        %v728 = vunpack.c.l.b16 %v552
        %v729 = vunpack.c.h.b16 %v552
        %v730 = vunpack.c.l.b16 %v553
        %v731 = vunpack.c.h.b16 %v553
        %v732 = vunpack.c.l.b16 %v554
        %v733 = vunpack.c.h.b16 %v554
        %v734 = vunpack.c.l.b16 %v555
        %v735 = vunpack.c.h.b16 %v555
        %v736 = vunpack.c.l.b16 %v556
        %v737 = vunpack.c.h.b16 %v556
        %v738 = vunpack.c.l.b16 %v557
        %v739 = vunpack.c.h.b16 %v557
        %v740 = vunpack.c.l.b16 %v558
        %v741 = vunpack.c.h.b16 %v558
        %v742 = vunpack.c.l.b16 %v559
        %v743 = vunpack.c.h.b16 %v559
        %v744 = vunpack.c.l.b16 %v560
        %v745 = vunpack.c.h.b16 %v560
        %v746 = vunpack.c.l.b16 %v561
        %v747 = vunpack.c.h.b16 %v561
        %v748 = vunpack.c.l.b16 %v562
        %v749 = vunpack.c.h.b16 %v562
        %v750 = vunpack.c.l.b16 %v563
        %v751 = vunpack.c.h.b16 %v563
        %v752 = vunpack.c.l.b16 %v564
        %v753 = vunpack.c.h.b16 %v564
        %v754 = vunpack.c.l.b16 %v565
        %v755 = vunpack.c.h.b16 %v565
        %v756 = vunpack.c.l.b16 %v566
        %v757 = vunpack.c.h.b16 %v566
        %v758 = vunpack.c.l.b16 %v567
        %v759 = vunpack.c.h.b16 %v567
        %v760 = vunpack.c.l.b16 %v568
        %v761 = vunpack.c.h.b16 %v568
        %v762 = vunpack.c.l.b16 %v569
        %v763 = vunpack.c.h.b16 %v569
        %v764 = vunpack.c.l.b16 %v570
        %v765 = vunpack.c.h.b16 %v570
        %v766 = vunpack.c.l.b16 %v571
        %v767 = vunpack.c.h.b16 %v571
        %v768 = vunpack.c.l.b16 %v572
        %v769 = vunpack.c.h.b16 %v572
        %v770 = vunpack.c.l.b16 %v573
        %v771 = vunpack.c.h.b16 %v573
        %v772 = vunpack.c.l.b16 %v574
        %v773 = vunpack.c.h.b16 %v574
        %v774 = vunpack.c.l.b16 %v575
        %v775 = vunpack.c.h.b16 %v575
        %v776 = vunpack.c.l.b16 %v576
        %v777 = vunpack.c.h.b16 %v576
        %v778 = vunpack.c.l.b16 %v577
        %v779 = vunpack.c.h.b16 %v577
        %v780 = vpack.c.b16 %v656, %v652
        %v781 = vpack.c.b16 %v657, %v653
        %v782 = vpack.c.b16 %v658, %v654
        %v783 = vpack.c.b16 %v659, %v655
        %v784 = vpack.c.b16 %v664, %v660
        %v785 = vpack.c.b16 %v665, %v661
        %v786 = vpack.c.b16 %v666, %v662
        %v787 = vpack.c.b16 %v667, %v663
        %v788 = vpack.c.b16 %v672, %v668
        %v789 = vpack.c.b16 %v673, %v669
        %v790 = vpack.c.b16 %v674, %v670
        %v791 = vpack.c.b16 %v675, %v671
        %v792 = vpack.c.b16 %v680, %v676
        %v793 = vpack.c.b16 %v681, %v677
        %v794 = vpack.c.b16 %v682, %v678
        %v795 = vpack.c.b16 %v683, %v679
        %v796 = vpack.c.b16 %v688, %v684
        %v797 = vpack.c.b16 %v689, %v685
        %v798 = vpack.c.b16 %v690, %v686
        %v799 = vpack.c.b16 %v691, %v687
        %v800 = vpack.c.b16 %v696, %v692
        %v801 = vpack.c.b16 %v697, %v693
        %v802 = vpack.c.b16 %v698, %v694
        %v803 = vpack.c.b16 %v699, %v695
        %v804 = vpack.c.b16 %v704, %v700
        %v805 = vpack.c.b16 %v705, %v701
        %v806 = vpack.c.b16 %v706, %v702
        %v807 = vpack.c.b16 %v707, %v703
        %v808 = vpack.c.b16 %v712, %v708
        %v809 = vpack.c.b16 %v713, %v709
        %v810 = vpack.c.b16 %v714, %v710
        %v811 = vpack.c.b16 %v715, %v711
        %v812 = vpack.c.b16 %v720, %v716
        %v813 = vpack.c.b16 %v721, %v717
        %v814 = vpack.c.b16 %v722, %v718
        %v815 = vpack.c.b16 %v723, %v719
        %v816 = vpack.c.b16 %v728, %v724
        %v817 = vpack.c.b16 %v729, %v725
        %v818 = vpack.c.b16 %v730, %v726
        %v819 = vpack.c.b16 %v731, %v727
        %v820 = vpack.c.b16 %v736, %v732
        %v821 = vpack.c.b16 %v737, %v733
        %v822 = vpack.c.b16 %v738, %v734
        %v823 = vpack.c.b16 %v739, %v735
        %v824 = vpack.c.b16 %v744, %v740
        %v825 = vpack.c.b16 %v745, %v741
        %v826 = vpack.c.b16 %v746, %v742
        %v827 = vpack.c.b16 %v747, %v743
        %v828 = vpack.c.b16 %v752, %v748
        %v829 = vpack.c.b16 %v753, %v749
        %v830 = vpack.c.b16 %v754, %v750
        %v831 = vpack.c.b16 %v755, %v751
        %v832 = vpack.c.b16 %v760, %v756
        %v833 = vpack.c.b16 %v761, %v757
        %v834 = vpack.c.b16 %v762, %v758
        %v835 = vpack.c.b16 %v763, %v759
        %v836 = vpack.c.b16 %v768, %v764
        %v837 = vpack.c.b16 %v769, %v765
        %v838 = vpack.c.b16 %v770, %v766
        %v839 = vpack.c.b16 %v771, %v767
        %v840 = vpack.c.b16 %v776, %v772
        %v841 = vpack.c.b16 %v777, %v773
        %v842 = vpack.c.b16 %v778, %v774
        %v843 = vpack.c.b16 %v779, %v775
        %908 = vmatprep.subr.bf16.mxu0 %v809
        %909 = vmatpush1.bf16.msra.mxu0 %v808
        %910 = vmatprep.subr.bf16.mxu0 %v805
        %911 = vmatpush1.bf16.msra.mxu0 %v804
        %912 = vmatprep.subr.bf16.mxu0 %v801
        %913 = vmatpush1.bf16.msra.mxu0 %v800
        %914 = vmatprep.subr.bf16.mxu0 %v797
        %915 = vmatpush1.bf16.msra.mxu0 %v796
        %916 = vmatprep.subr.bf16.mxu0 %v793
        %917 = vmatpush1.bf16.msra.mxu0 %v792
        %918 = vmatprep.subr.bf16.mxu0 %v789
        %919 = vmatpush1.bf16.msra.mxu0 %v788
        %920 = vmatprep.subr.bf16.mxu0 %v785
        %921 = vmatpush1.bf16.msra.mxu0 %v784
        %922 = vmatprep.subr.bf16.mxu0 %v781
        %923 = vmatpush1.bf16.msra.mxu0 %v780
        %924 = vmatprep.subr.bf16.mxu0 %v841
        %925 = vmatpush2.bf16.msra.mxu0 %v840
        %926 = vmatprep.subr.bf16.mxu0 %v837
        %927 = vmatpush2.bf16.msra.mxu0 %v836
        %928 = vmatprep.subr.bf16.mxu0 %v833
        %929 = vmatpush2.bf16.msra.mxu0 %v832
        %930 = vmatprep.subr.bf16.mxu0 %v829
        %931 = vmatpush2.bf16.msra.mxu0 %v828
        %932 = vmatprep.subr.bf16.mxu0 %v825
        %933 = vmatpush2.bf16.msra.mxu0 %v824
        %934 = vmatprep.subr.bf16.mxu0 %v821
        %935 = vmatpush2.bf16.msra.mxu0 %v820
        %936 = vmatprep.subr.bf16.mxu0 %v817
        %937 = vmatpush2.bf16.msra.mxu0 %v816
        %938 = vmatprep.subr.bf16.mxu0 %v813
        %939 = vmatpush2.bf16.msra.mxu0 %v812
        %940 = vmatprep.mubr.bf16.mxu0 %v585
        %941 = vmatmul.mubr.bf16.gmra.mxu0 %v584
        %v942 = vpop.f32.mrf.mxu0
        %v943 = vadd.f32 0.0, %v942
        %v944 = vpop.f32.mrf.mxu0
        %v945 = vadd.f32 0.0, %v944
        %v946 = vpop.f32.mrf.mxu0
        %v947 = vadd.f32 0.0, %v946
        %v948 = vpop.f32.mrf.mxu0
        %v949 = vadd.f32 0.0, %v948
        %950 = vdwg.mxu0
        %951 = vmatprep.subr.bf16.mxu0 %v811
        %952 = vmatpush1.bf16.msra.mxu0 %v810
        %953 = vmatprep.subr.bf16.mxu0 %v807
        %954 = vmatpush1.bf16.msra.mxu0 %v806
        %955 = vmatprep.subr.bf16.mxu0 %v803
        %956 = vmatpush1.bf16.msra.mxu0 %v802
        %957 = vmatprep.subr.bf16.mxu0 %v799
        %958 = vmatpush1.bf16.msra.mxu0 %v798
        %959 = vmatprep.subr.bf16.mxu0 %v795
        %960 = vmatpush1.bf16.msra.mxu0 %v794
        %961 = vmatprep.subr.bf16.mxu0 %v791
        %962 = vmatpush1.bf16.msra.mxu0 %v790
        %963 = vmatprep.subr.bf16.mxu0 %v787
        %964 = vmatpush1.bf16.msra.mxu0 %v786
        %965 = vmatprep.subr.bf16.mxu0 %v783
        %966 = vmatpush1.bf16.msra.mxu0 %v782
        %967 = vmatprep.subr.bf16.mxu0 %v843
        %968 = vmatpush2.bf16.msra.mxu0 %v842
        %969 = vmatprep.subr.bf16.mxu0 %v839
        %970 = vmatpush2.bf16.msra.mxu0 %v838
        %971 = vmatprep.subr.bf16.mxu0 %v835
        %972 = vmatpush2.bf16.msra.mxu0 %v834
        %973 = vmatprep.subr.bf16.mxu0 %v831
        %974 = vmatpush2.bf16.msra.mxu0 %v830
        %975 = vmatprep.subr.bf16.mxu0 %v827
        %976 = vmatpush2.bf16.msra.mxu0 %v826
        %977 = vmatprep.subr.bf16.mxu0 %v823
        %978 = vmatpush2.bf16.msra.mxu0 %v822
        %979 = vmatprep.subr.bf16.mxu0 %v819
        %980 = vmatpush2.bf16.msra.mxu0 %v818
        %981 = vmatprep.subr.bf16.mxu0 %v815
        %982 = vmatpush2.bf16.msra.mxu0 %v814
        %983 = vmatprep.mubr.bf16.mxu0 %v585
        %984 = vmatmul.mubr.bf16.gmra.mxu0 %v584
        %v985 = vpop.f32.mrf.mxu0
        %v986 = vadd.f32 0.0, %v985
        %v987 = vpop.f32.mrf.mxu0
        %v988 = vadd.f32 0.0, %v987
        %v989 = vpop.f32.mrf.mxu0
        %v990 = vadd.f32 0.0, %v989
        %v991 = vpop.f32.mrf.mxu0
        %v992 = vadd.f32 0.0, %v991
        %993 = vdwg.mxu0
        %v994 = vadd.f32 %v504, %v943
        %v995 = vadd.f32 %v505, %v945
        %v996 = vadd.f32 %v506, %v986
        %v997 = vadd.f32 %v507, %v988
        %v998 = vadd.f32 %v508, %v947
        %v999 = vadd.f32 %v509, %v949
        %v1000 = vadd.f32 %v510, %v990
        %v1001 = vadd.f32 %v511, %v992
        %1002 = vst [vmem:[#allocation2] sm:$0xff] %v994
        %1003 = vst [vmem:[#allocation2 + $0x8] sm:$0xff] %v995
        %1004 = vst [vmem:[#allocation2 + $0x10] sm:$0xff] %v996
        %1005 = vst [vmem:[#allocation2 + $0x18] sm:$0xff] %v997
        %1006 = vst [vmem:[#allocation2 + $0x20] sm:$0xff] %v998
        %1007 = vst [vmem:[#allocation2 + $0x28] sm:$0xff] %v999
        %1008 = vst [vmem:[#allocation2 + $0x30] sm:$0xff] %v1000
        %1009 = vst [vmem:[#allocation2 + $0x38] sm:$0xff] %v1001
        %v1010 = vld [vmem:[#allocation3] sm:$0xff]
        %v1011 = vld [vmem:[#allocation3 + $0x8] sm:$0xff]
        %v1012 = vld [vmem:[#allocation3 + $0x10] sm:$0xff]
        %v1013 = vld [vmem:[#allocation3 + $0x18] sm:$0xff]
        %v1014 = vld [vmem:[#allocation3 + $0x20] sm:$0xff]
        %v1015 = vld [vmem:[#allocation3 + $0x28] sm:$0xff]
        %v1016 = vld [vmem:[#allocation3 + $0x30] sm:$0xff]
        %v1017 = vld [vmem:[#allocation3 + $0x38] sm:$0xff]
        %v1018 = vld [vmem:[%s411] sm:$0xff]
        %v1019 = vld [vmem:[%s411 + $0x8] sm:$0xff]
        %v1020 = vld [vmem:[%s429] sm:$0xff]
        %v1021 = vld [vmem:[%s429 + $0x8] sm:$0xff]
        %v1022 = vld [vmem:[%s429 + $0x10] sm:$0xff]
        %v1023 = vld [vmem:[%s429 + $0x18] sm:$0xff]
        %v1024 = vld [vmem:[%s429 + $0x20] sm:$0xff]
        %v1025 = vld [vmem:[%s429 + $0x28] sm:$0xff]
        %v1026 = vld [vmem:[%s429 + $0x30] sm:$0xff]
        %v1027 = vld [vmem:[%s429 + $0x38] sm:$0xff]
        %v1028 = vld [vmem:[%s429 + $0x40] sm:$0xff]
        %v1029 = vld [vmem:[%s429 + $0x48] sm:$0xff]
        %v1030 = vld [vmem:[%s429 + $0x50] sm:$0xff]
        %v1031 = vld [vmem:[%s429 + $0x58] sm:$0xff]
        %v1032 = vld [vmem:[%s429 + $0x60] sm:$0xff]
        %v1033 = vld [vmem:[%s429 + $0x68] sm:$0xff]
        %v1034 = vld [vmem:[%s429 + $0x70] sm:$0xff]
        %v1035 = vld [vmem:[%s429 + $0x78] sm:$0xff]
        %v1036 = vld [vmem:[%s429 + $0x80] sm:$0xff]
        %v1037 = vld [vmem:[%s429 + $0x88] sm:$0xff]
        %v1038 = vld [vmem:[%s429 + $0x90] sm:$0xff]
        %v1039 = vld [vmem:[%s429 + $0x98] sm:$0xff]
        %v1040 = vld [vmem:[%s429 + $0xa0] sm:$0xff]
        %v1041 = vld [vmem:[%s429 + $0xa8] sm:$0xff]
        %v1042 = vld [vmem:[%s429 + $0xb0] sm:$0xff]
        %v1043 = vld [vmem:[%s429 + $0xb8] sm:$0xff]
        %v1044 = vld [vmem:[%s429 + $0xc0] sm:$0xff]
        %v1045 = vld [vmem:[%s429 + $0xc8] sm:$0xff]
        %v1046 = vld [vmem:[%s429 + $0xd0] sm:$0xff]
        %v1047 = vld [vmem:[%s429 + $0xd8] sm:$0xff]
        %v1048 = vld [vmem:[%s429 + $0xe0] sm:$0xff]
        %v1049 = vld [vmem:[%s429 + $0xe8] sm:$0xff]
        %v1050 = vld [vmem:[%s429 + $0xf0] sm:$0xff]
        %v1051 = vld [vmem:[%s429 + $0xf8] sm:$0xff]
        %v1052 = vld [vmem:[%s429 + $0x100] sm:$0xff]
        %v1053 = vld [vmem:[%s429 + $0x108] sm:$0xff]
        %v1054 = vld [vmem:[%s429 + $0x110] sm:$0xff]
        %v1055 = vld [vmem:[%s429 + $0x118] sm:$0xff]
        %v1056 = vld [vmem:[%s429 + $0x120] sm:$0xff]
        %v1057 = vld [vmem:[%s429 + $0x128] sm:$0xff]
        %v1058 = vld [vmem:[%s429 + $0x130] sm:$0xff]
        %v1059 = vld [vmem:[%s429 + $0x138] sm:$0xff]
        %v1060 = vld [vmem:[%s429 + $0x140] sm:$0xff]
        %v1061 = vld [vmem:[%s429 + $0x148] sm:$0xff]
        %v1062 = vld [vmem:[%s429 + $0x150] sm:$0xff]
        %v1063 = vld [vmem:[%s429 + $0x158] sm:$0xff]
        %v1064 = vld [vmem:[%s429 + $0x160] sm:$0xff]
        %v1065 = vld [vmem:[%s429 + $0x168] sm:$0xff]
        %v1066 = vld [vmem:[%s429 + $0x170] sm:$0xff]
        %v1067 = vld [vmem:[%s429 + $0x178] sm:$0xff]
        %v1068 = vld [vmem:[%s429 + $0x180] sm:$0xff]
        %v1069 = vld [vmem:[%s429 + $0x188] sm:$0xff]
        %v1070 = vld [vmem:[%s429 + $0x190] sm:$0xff]
        %v1071 = vld [vmem:[%s429 + $0x198] sm:$0xff]
        %v1072 = vld [vmem:[%s429 + $0x1a0] sm:$0xff]
        %v1073 = vld [vmem:[%s429 + $0x1a8] sm:$0xff]
        %v1074 = vld [vmem:[%s429 + $0x1b0] sm:$0xff]
        %v1075 = vld [vmem:[%s429 + $0x1b8] sm:$0xff]
        %v1076 = vld [vmem:[%s429 + $0x1c0] sm:$0xff]
        %v1077 = vld [vmem:[%s429 + $0x1c8] sm:$0xff]
        %v1078 = vld [vmem:[%s429 + $0x1d0] sm:$0xff]
        %v1079 = vld [vmem:[%s429 + $0x1d8] sm:$0xff]
        %v1080 = vld [vmem:[%s429 + $0x1e0] sm:$0xff]
        %v1081 = vld [vmem:[%s429 + $0x1e8] sm:$0xff]
        %v1082 = vld [vmem:[%s429 + $0x1f0] sm:$0xff]
        %v1083 = vld [vmem:[%s429 + $0x1f8] sm:$0xff]
        %v1086 = vunpack.c.l.b16 %v1018
        %v1087 = vunpack.c.h.b16 %v1018
        %v1088 = vunpack.c.l.b16 %v1019
        %v1089 = vunpack.c.h.b16 %v1019
        %v1090 = vpack.c.b16 %v1088, %v1086
        %v1091 = vpack.c.b16 %v1089, %v1087
        %v1158 = vunpack.c.l.b16 %v1020
        %v1159 = vunpack.c.h.b16 %v1020
        %v1160 = vunpack.c.l.b16 %v1021
        %v1161 = vunpack.c.h.b16 %v1021
        %v1162 = vunpack.c.l.b16 %v1022
        %v1163 = vunpack.c.h.b16 %v1022
        %v1164 = vunpack.c.l.b16 %v1023
        %v1165 = vunpack.c.h.b16 %v1023
        %v1166 = vunpack.c.l.b16 %v1024
        %v1167 = vunpack.c.h.b16 %v1024
        %v1168 = vunpack.c.l.b16 %v1025
        %v1169 = vunpack.c.h.b16 %v1025
        %v1170 = vunpack.c.l.b16 %v1026
        %v1171 = vunpack.c.h.b16 %v1026
        %v1172 = vunpack.c.l.b16 %v1027
        %v1173 = vunpack.c.h.b16 %v1027
        %v1174 = vunpack.c.l.b16 %v1028
        %v1175 = vunpack.c.h.b16 %v1028
        %v1176 = vunpack.c.l.b16 %v1029
        %v1177 = vunpack.c.h.b16 %v1029
        %v1178 = vunpack.c.l.b16 %v1030
        %v1179 = vunpack.c.h.b16 %v1030
        %v1180 = vunpack.c.l.b16 %v1031
        %v1181 = vunpack.c.h.b16 %v1031
        %v1182 = vunpack.c.l.b16 %v1032
        %v1183 = vunpack.c.h.b16 %v1032
        %v1184 = vunpack.c.l.b16 %v1033
        %v1185 = vunpack.c.h.b16 %v1033
        %v1186 = vunpack.c.l.b16 %v1034
        %v1187 = vunpack.c.h.b16 %v1034
        %v1188 = vunpack.c.l.b16 %v1035
        %v1189 = vunpack.c.h.b16 %v1035
        %v1190 = vunpack.c.l.b16 %v1036
        %v1191 = vunpack.c.h.b16 %v1036
        %v1192 = vunpack.c.l.b16 %v1037
        %v1193 = vunpack.c.h.b16 %v1037
        %v1194 = vunpack.c.l.b16 %v1038
        %v1195 = vunpack.c.h.b16 %v1038
        %v1196 = vunpack.c.l.b16 %v1039
        %v1197 = vunpack.c.h.b16 %v1039
        %v1198 = vunpack.c.l.b16 %v1040
        %v1199 = vunpack.c.h.b16 %v1040
        %v1200 = vunpack.c.l.b16 %v1041
        %v1201 = vunpack.c.h.b16 %v1041
        %v1202 = vunpack.c.l.b16 %v1042
        %v1203 = vunpack.c.h.b16 %v1042
        %v1204 = vunpack.c.l.b16 %v1043
        %v1205 = vunpack.c.h.b16 %v1043
        %v1206 = vunpack.c.l.b16 %v1044
        %v1207 = vunpack.c.h.b16 %v1044
        %v1208 = vunpack.c.l.b16 %v1045
        %v1209 = vunpack.c.h.b16 %v1045
        %v1210 = vunpack.c.l.b16 %v1046
        %v1211 = vunpack.c.h.b16 %v1046
        %v1212 = vunpack.c.l.b16 %v1047
        %v1213 = vunpack.c.h.b16 %v1047
        %v1214 = vunpack.c.l.b16 %v1048
        %v1215 = vunpack.c.h.b16 %v1048
        %v1216 = vunpack.c.l.b16 %v1049
        %v1217 = vunpack.c.h.b16 %v1049
        %v1218 = vunpack.c.l.b16 %v1050
        %v1219 = vunpack.c.h.b16 %v1050
        %v1220 = vunpack.c.l.b16 %v1051
        %v1221 = vunpack.c.h.b16 %v1051
        %v1222 = vunpack.c.l.b16 %v1052
        %v1223 = vunpack.c.h.b16 %v1052
        %v1224 = vunpack.c.l.b16 %v1053
        %v1225 = vunpack.c.h.b16 %v1053
        %v1226 = vunpack.c.l.b16 %v1054
        %v1227 = vunpack.c.h.b16 %v1054
        %v1228 = vunpack.c.l.b16 %v1055
        %v1229 = vunpack.c.h.b16 %v1055
        %v1230 = vunpack.c.l.b16 %v1056
        %v1231 = vunpack.c.h.b16 %v1056
        %v1232 = vunpack.c.l.b16 %v1057
        %v1233 = vunpack.c.h.b16 %v1057
        %v1234 = vunpack.c.l.b16 %v1058
        %v1235 = vunpack.c.h.b16 %v1058
        %v1236 = vunpack.c.l.b16 %v1059
        %v1237 = vunpack.c.h.b16 %v1059
        %v1238 = vunpack.c.l.b16 %v1060
        %v1239 = vunpack.c.h.b16 %v1060
        %v1240 = vunpack.c.l.b16 %v1061
        %v1241 = vunpack.c.h.b16 %v1061
        %v1242 = vunpack.c.l.b16 %v1062
        %v1243 = vunpack.c.h.b16 %v1062
        %v1244 = vunpack.c.l.b16 %v1063
        %v1245 = vunpack.c.h.b16 %v1063
        %v1246 = vunpack.c.l.b16 %v1064
        %v1247 = vunpack.c.h.b16 %v1064
        %v1248 = vunpack.c.l.b16 %v1065
        %v1249 = vunpack.c.h.b16 %v1065
        %v1250 = vunpack.c.l.b16 %v1066
        %v1251 = vunpack.c.h.b16 %v1066
        %v1252 = vunpack.c.l.b16 %v1067
        %v1253 = vunpack.c.h.b16 %v1067
        %v1254 = vunpack.c.l.b16 %v1068
        %v1255 = vunpack.c.h.b16 %v1068
        %v1256 = vunpack.c.l.b16 %v1069
        %v1257 = vunpack.c.h.b16 %v1069
        %v1258 = vunpack.c.l.b16 %v1070
        %v1259 = vunpack.c.h.b16 %v1070
        %v1260 = vunpack.c.l.b16 %v1071
        %v1261 = vunpack.c.h.b16 %v1071
        %v1262 = vunpack.c.l.b16 %v1072
        %v1263 = vunpack.c.h.b16 %v1072
        %v1264 = vunpack.c.l.b16 %v1073
        %v1265 = vunpack.c.h.b16 %v1073
        %v1266 = vunpack.c.l.b16 %v1074
        %v1267 = vunpack.c.h.b16 %v1074
        %v1268 = vunpack.c.l.b16 %v1075
        %v1269 = vunpack.c.h.b16 %v1075
        %v1270 = vunpack.c.l.b16 %v1076
        %v1271 = vunpack.c.h.b16 %v1076
        %v1272 = vunpack.c.l.b16 %v1077
        %v1273 = vunpack.c.h.b16 %v1077
        %v1274 = vunpack.c.l.b16 %v1078
        %v1275 = vunpack.c.h.b16 %v1078
        %v1276 = vunpack.c.l.b16 %v1079
        %v1277 = vunpack.c.h.b16 %v1079
        %v1278 = vunpack.c.l.b16 %v1080
        %v1279 = vunpack.c.h.b16 %v1080
        %v1280 = vunpack.c.l.b16 %v1081
        %v1281 = vunpack.c.h.b16 %v1081
        %v1282 = vunpack.c.l.b16 %v1082
        %v1283 = vunpack.c.h.b16 %v1082
        %v1284 = vunpack.c.l.b16 %v1083
        %v1285 = vunpack.c.h.b16 %v1083
        %v1286 = vpack.c.b16 %v1162, %v1158
        %v1287 = vpack.c.b16 %v1163, %v1159
        %v1288 = vpack.c.b16 %v1164, %v1160
        %v1289 = vpack.c.b16 %v1165, %v1161
        %v1290 = vpack.c.b16 %v1170, %v1166
        %v1291 = vpack.c.b16 %v1171, %v1167
        %v1292 = vpack.c.b16 %v1172, %v1168
        %v1293 = vpack.c.b16 %v1173, %v1169
        %v1294 = vpack.c.b16 %v1178, %v1174
        %v1295 = vpack.c.b16 %v1179, %v1175
        %v1296 = vpack.c.b16 %v1180, %v1176
        %v1297 = vpack.c.b16 %v1181, %v1177
        %v1298 = vpack.c.b16 %v1186, %v1182
        %v1299 = vpack.c.b16 %v1187, %v1183
        %v1300 = vpack.c.b16 %v1188, %v1184
        %v1301 = vpack.c.b16 %v1189, %v1185
        %v1302 = vpack.c.b16 %v1194, %v1190
        %v1303 = vpack.c.b16 %v1195, %v1191
        %v1304 = vpack.c.b16 %v1196, %v1192
        %v1305 = vpack.c.b16 %v1197, %v1193
        %v1306 = vpack.c.b16 %v1202, %v1198
        %v1307 = vpack.c.b16 %v1203, %v1199
        %v1308 = vpack.c.b16 %v1204, %v1200
        %v1309 = vpack.c.b16 %v1205, %v1201
        %v1310 = vpack.c.b16 %v1210, %v1206
        %v1311 = vpack.c.b16 %v1211, %v1207
        %v1312 = vpack.c.b16 %v1212, %v1208
        %v1313 = vpack.c.b16 %v1213, %v1209
        %v1314 = vpack.c.b16 %v1218, %v1214
        %v1315 = vpack.c.b16 %v1219, %v1215
        %v1316 = vpack.c.b16 %v1220, %v1216
        %v1317 = vpack.c.b16 %v1221, %v1217
        %v1318 = vpack.c.b16 %v1226, %v1222
        %v1319 = vpack.c.b16 %v1227, %v1223
        %v1320 = vpack.c.b16 %v1228, %v1224
        %v1321 = vpack.c.b16 %v1229, %v1225
        %v1322 = vpack.c.b16 %v1234, %v1230
        %v1323 = vpack.c.b16 %v1235, %v1231
        %v1324 = vpack.c.b16 %v1236, %v1232
        %v1325 = vpack.c.b16 %v1237, %v1233
        %v1326 = vpack.c.b16 %v1242, %v1238
        %v1327 = vpack.c.b16 %v1243, %v1239
        %v1328 = vpack.c.b16 %v1244, %v1240
        %v1329 = vpack.c.b16 %v1245, %v1241
        %v1330 = vpack.c.b16 %v1250, %v1246
        %v1331 = vpack.c.b16 %v1251, %v1247
        %v1332 = vpack.c.b16 %v1252, %v1248
        %v1333 = vpack.c.b16 %v1253, %v1249
        %v1334 = vpack.c.b16 %v1258, %v1254
        %v1335 = vpack.c.b16 %v1259, %v1255
        %v1336 = vpack.c.b16 %v1260, %v1256
        %v1337 = vpack.c.b16 %v1261, %v1257
        %v1338 = vpack.c.b16 %v1266, %v1262
        %v1339 = vpack.c.b16 %v1267, %v1263
        %v1340 = vpack.c.b16 %v1268, %v1264
        %v1341 = vpack.c.b16 %v1269, %v1265
        %v1342 = vpack.c.b16 %v1274, %v1270
        %v1343 = vpack.c.b16 %v1275, %v1271
        %v1344 = vpack.c.b16 %v1276, %v1272
        %v1345 = vpack.c.b16 %v1277, %v1273
        %v1346 = vpack.c.b16 %v1282, %v1278
        %v1347 = vpack.c.b16 %v1283, %v1279
        %v1348 = vpack.c.b16 %v1284, %v1280
        %v1349 = vpack.c.b16 %v1285, %v1281
        %1414 = vmatprep.subr.bf16.mxu0 %v1315
        %1415 = vmatpush1.bf16.msra.mxu0 %v1314
        %1416 = vmatprep.subr.bf16.mxu0 %v1311
        %1417 = vmatpush1.bf16.msra.mxu0 %v1310
        %1418 = vmatprep.subr.bf16.mxu0 %v1307
        %1419 = vmatpush1.bf16.msra.mxu0 %v1306
        %1420 = vmatprep.subr.bf16.mxu0 %v1303
        %1421 = vmatpush1.bf16.msra.mxu0 %v1302
        %1422 = vmatprep.subr.bf16.mxu0 %v1299
        %1423 = vmatpush1.bf16.msra.mxu0 %v1298
        %1424 = vmatprep.subr.bf16.mxu0 %v1295
        %1425 = vmatpush1.bf16.msra.mxu0 %v1294
        %1426 = vmatprep.subr.bf16.mxu0 %v1291
        %1427 = vmatpush1.bf16.msra.mxu0 %v1290
        %1428 = vmatprep.subr.bf16.mxu0 %v1287
        %1429 = vmatpush1.bf16.msra.mxu0 %v1286
        %1430 = vmatprep.subr.bf16.mxu0 %v1347
        %1431 = vmatpush2.bf16.msra.mxu0 %v1346
        %1432 = vmatprep.subr.bf16.mxu0 %v1343
        %1433 = vmatpush2.bf16.msra.mxu0 %v1342
        %1434 = vmatprep.subr.bf16.mxu0 %v1339
        %1435 = vmatpush2.bf16.msra.mxu0 %v1338
        %1436 = vmatprep.subr.bf16.mxu0 %v1335
        %1437 = vmatpush2.bf16.msra.mxu0 %v1334
        %1438 = vmatprep.subr.bf16.mxu0 %v1331
        %1439 = vmatpush2.bf16.msra.mxu0 %v1330
        %1440 = vmatprep.subr.bf16.mxu0 %v1327
        %1441 = vmatpush2.bf16.msra.mxu0 %v1326
        %1442 = vmatprep.subr.bf16.mxu0 %v1323
        %1443 = vmatpush2.bf16.msra.mxu0 %v1322
        %1444 = vmatprep.subr.bf16.mxu0 %v1319
        %1445 = vmatpush2.bf16.msra.mxu0 %v1318
        %1446 = vmatprep.mubr.bf16.mxu0 %v1091
        %1447 = vmatmul.mubr.bf16.gmra.mxu0 %v1090
        %v1448 = vpop.f32.mrf.mxu0
        %v1449 = vadd.f32 0.0, %v1448
        %v1450 = vpop.f32.mrf.mxu0
        %v1451 = vadd.f32 0.0, %v1450
        %v1452 = vpop.f32.mrf.mxu0
        %v1453 = vadd.f32 0.0, %v1452
        %v1454 = vpop.f32.mrf.mxu0
        %v1455 = vadd.f32 0.0, %v1454
        %1456 = vdwg.mxu0
        %1457 = vmatprep.subr.bf16.mxu0 %v1317
        %1458 = vmatpush1.bf16.msra.mxu0 %v1316
        %1459 = vmatprep.subr.bf16.mxu0 %v1313
        %1460 = vmatpush1.bf16.msra.mxu0 %v1312
        %1461 = vmatprep.subr.bf16.mxu0 %v1309
        %1462 = vmatpush1.bf16.msra.mxu0 %v1308
        %1463 = vmatprep.subr.bf16.mxu0 %v1305
        %1464 = vmatpush1.bf16.msra.mxu0 %v1304
        %1465 = vmatprep.subr.bf16.mxu0 %v1301
        %1466 = vmatpush1.bf16.msra.mxu0 %v1300
        %1467 = vmatprep.subr.bf16.mxu0 %v1297
        %1468 = vmatpush1.bf16.msra.mxu0 %v1296
        %1469 = vmatprep.subr.bf16.mxu0 %v1293
        %1470 = vmatpush1.bf16.msra.mxu0 %v1292
        %1471 = vmatprep.subr.bf16.mxu0 %v1289
        %1472 = vmatpush1.bf16.msra.mxu0 %v1288
        %1473 = vmatprep.subr.bf16.mxu0 %v1349
        %1474 = vmatpush2.bf16.msra.mxu0 %v1348
        %1475 = vmatprep.subr.bf16.mxu0 %v1345
        %1476 = vmatpush2.bf16.msra.mxu0 %v1344
        %1477 = vmatprep.subr.bf16.mxu0 %v1341
        %1478 = vmatpush2.bf16.msra.mxu0 %v1340
        %1479 = vmatprep.subr.bf16.mxu0 %v1337
        %1480 = vmatpush2.bf16.msra.mxu0 %v1336
        %1481 = vmatprep.subr.bf16.mxu0 %v1333
        %1482 = vmatpush2.bf16.msra.mxu0 %v1332
        %1483 = vmatprep.subr.bf16.mxu0 %v1329
        %1484 = vmatpush2.bf16.msra.mxu0 %v1328
        %1485 = vmatprep.subr.bf16.mxu0 %v1325
        %1486 = vmatpush2.bf16.msra.mxu0 %v1324
        %1487 = vmatprep.subr.bf16.mxu0 %v1321
        %1488 = vmatpush2.bf16.msra.mxu0 %v1320
        %1489 = vmatprep.mubr.bf16.mxu0 %v1091
        %1490 = vmatmul.mubr.bf16.gmra.mxu0 %v1090
        %v1491 = vpop.f32.mrf.mxu0
        %v1492 = vadd.f32 0.0, %v1491
        %v1493 = vpop.f32.mrf.mxu0
        %v1494 = vadd.f32 0.0, %v1493
        %v1495 = vpop.f32.mrf.mxu0
        %v1496 = vadd.f32 0.0, %v1495
        %v1497 = vpop.f32.mrf.mxu0
        %v1498 = vadd.f32 0.0, %v1497
        %1499 = vdwg.mxu0
        %v1500 = vadd.f32 %v1010, %v1449
        %v1501 = vadd.f32 %v1011, %v1451
        %v1502 = vadd.f32 %v1012, %v1492
        %v1503 = vadd.f32 %v1013, %v1494
        %v1504 = vadd.f32 %v1014, %v1453
        %v1505 = vadd.f32 %v1015, %v1455
        %v1506 = vadd.f32 %v1016, %v1496
        %v1507 = vadd.f32 %v1017, %v1498
        %1508 = vst [vmem:[#allocation3] sm:$0xff] %v1500
        %1509 = vst [vmem:[#allocation3 + $0x8] sm:$0xff] %v1501
        %1510 = vst [vmem:[#allocation3 + $0x10] sm:$0xff] %v1502
        %1511 = vst [vmem:[#allocation3 + $0x18] sm:$0xff] %v1503
        %1512 = vst [vmem:[#allocation3 + $0x20] sm:$0xff] %v1504
        %1513 = vst [vmem:[#allocation3 + $0x28] sm:$0xff] %v1505
        %1514 = vst [vmem:[#allocation3 + $0x30] sm:$0xff] %v1506
        %1515 = vst [vmem:[#allocation3 + $0x38] sm:$0xff] %v1507
        %p1516 = scmp.eq.s32.totalorder %s36, 2
        // Predicated region
        $region73: #{tpu_custom_call.1} parent=47 // pred_check
          %p1517 = pneg %p1516
        $region74: #{tpu_custom_call.1} parent=47 // pred_check_branch
          %1519 = sbr.rel (%p1517) target = $region76
        $region75: #{tpu_custom_call.1} parent=47 // pred_region
          %v1520 = vld [vmem:[#allocation2] sm:$0xff]
          %v1521 = vld [vmem:[#allocation2 + $0x8] sm:$0xff]
          %v1522 = vld [vmem:[#allocation2 + $0x10] sm:$0xff]
          %v1523 = vld [vmem:[#allocation2 + $0x18] sm:$0xff]
          %v1524 = vld [vmem:[#allocation2 + $0x20] sm:$0xff]
          %v1525 = vld [vmem:[#allocation2 + $0x28] sm:$0xff]
          %v1526 = vld [vmem:[#allocation2 + $0x30] sm:$0xff]
          %v1527 = vld [vmem:[#allocation2 + $0x38] sm:$0xff]
          %v1528 = vld [vmem:[%s5] sm:$0xf]
          %v1530 = vlaneseq
          %v1531 = vshrl.u32 %v1530, 7
          %v1532 = vsub.s32 0, %v1531
          %v1533 = vrot.slane %v1528, %v1532
          %v1534 = vlaneseq
          %v1535 = vshrl.u32 %v1534, 7
          %v1536 = vsub.s32 1, %v1535
          %v1537 = vrot.slane %v1528, %v1536
          %v1538 = vlaneseq
          %v1539 = vshrl.u32 %v1538, 7
          %v1540 = vsub.s32 2, %v1539
          %v1541 = vrot.slane %v1528, %v1540
          %v1542 = vlaneseq
          %v1543 = vshrl.u32 %v1542, 7
          %v1544 = vsub.s32 3, %v1543
          %v1545 = vrot.slane %v1528, %v1544
          %v1550 = vadd.f32 %v1520, %v1533
          %v1551 = vadd.f32 %v1521, %v1537
          %v1552 = vadd.f32 %v1522, %v1541
          %v1553 = vadd.f32 %v1523, %v1545
          %v1554 = vadd.f32 %v1524, %v1533
          %v1555 = vadd.f32 %v1525, %v1537
          %v1556 = vadd.f32 %v1526, %v1541
          %v1557 = vadd.f32 %v1527, %v1545
          %v1558 = vld [vmem:[#allocation3] sm:$0xff]
          %v1559 = vld [vmem:[#allocation3 + $0x8] sm:$0xff]
          %v1560 = vld [vmem:[#allocation3 + $0x10] sm:$0xff]
          %v1561 = vld [vmem:[#allocation3 + $0x18] sm:$0xff]
          %v1562 = vld [vmem:[#allocation3 + $0x20] sm:$0xff]
          %v1563 = vld [vmem:[#allocation3 + $0x28] sm:$0xff]
          %v1564 = vld [vmem:[#allocation3 + $0x30] sm:$0xff]
          %v1565 = vld [vmem:[#allocation3 + $0x38] sm:$0xff]
          %v1566 = vpack.c.bf16 %v1554, %v1550
          %v1567 = vpack.c.bf16 %v1555, %v1551
          %v1568 = vpack.c.bf16 %v1556, %v1552
          %v1569 = vpack.c.bf16 %v1557, %v1553
          %v1570 = vld [vmem:[#allocation12] sm:$0xff]
          %v1571 = vld [vmem:[#allocation12 + $0x8] sm:$0xff]
          %v1572 = vld [vmem:[#allocation12 + $0x10] sm:$0xff]
          %v1573 = vld [vmem:[#allocation12 + $0x18] sm:$0xff]
          %v1574 = vld [vmem:[#allocation12 + $0x20] sm:$0xff]
          %v1575 = vld [vmem:[#allocation12 + $0x28] sm:$0xff]
          %v1576 = vld [vmem:[#allocation12 + $0x30] sm:$0xff]
          %v1577 = vld [vmem:[#allocation12 + $0x38] sm:$0xff]
          %v1578 = vld [vmem:[#allocation12 + $0x40] sm:$0xff]
          %v1579 = vld [vmem:[#allocation12 + $0x48] sm:$0xff]
          %v1580 = vld [vmem:[#allocation12 + $0x50] sm:$0xff]
          %v1581 = vld [vmem:[#allocation12 + $0x58] sm:$0xff]
          %v1582 = vld [vmem:[#allocation12 + $0x60] sm:$0xff]
          %v1583 = vld [vmem:[#allocation12 + $0x68] sm:$0xff]
          %v1584 = vld [vmem:[#allocation12 + $0x70] sm:$0xff]
          %v1585 = vld [vmem:[#allocation12 + $0x78] sm:$0xff]
          %v1586 = vld [vmem:[#allocation12 + $0x80] sm:$0xff]
          %v1587 = vld [vmem:[#allocation12 + $0x88] sm:$0xff]
          %v1588 = vld [vmem:[#allocation12 + $0x90] sm:$0xff]
          %v1589 = vld [vmem:[#allocation12 + $0x98] sm:$0xff]
          %v1590 = vld [vmem:[#allocation12 + $0xa0] sm:$0xff]
          %v1591 = vld [vmem:[#allocation12 + $0xa8] sm:$0xff]
          %v1592 = vld [vmem:[#allocation12 + $0xb0] sm:$0xff]
          %v1593 = vld [vmem:[#allocation12 + $0xb8] sm:$0xff]
          %v1594 = vld [vmem:[#allocation12 + $0xc0] sm:$0xff]
          %v1595 = vld [vmem:[#allocation12 + $0xc8] sm:$0xff]
          %v1596 = vld [vmem:[#allocation12 + $0xd0] sm:$0xff]
          %v1597 = vld [vmem:[#allocation12 + $0xd8] sm:$0xff]
          %v1598 = vld [vmem:[#allocation12 + $0xe0] sm:$0xff]
          %v1599 = vld [vmem:[#allocation12 + $0xe8] sm:$0xff]
          %v1600 = vld [vmem:[#allocation12 + $0xf0] sm:$0xff]
          %v1601 = vld [vmem:[#allocation12 + $0xf8] sm:$0xff]
          %v1602 = vld [vmem:[#allocation12 + $0x100] sm:$0xff]
          %v1603 = vld [vmem:[#allocation12 + $0x108] sm:$0xff]
          %v1604 = vld [vmem:[#allocation12 + $0x110] sm:$0xff]
          %v1605 = vld [vmem:[#allocation12 + $0x118] sm:$0xff]
          %v1606 = vld [vmem:[#allocation12 + $0x120] sm:$0xff]
          %v1607 = vld [vmem:[#allocation12 + $0x128] sm:$0xff]
          %v1608 = vld [vmem:[#allocation12 + $0x130] sm:$0xff]
          %v1609 = vld [vmem:[#allocation12 + $0x138] sm:$0xff]
          %v1610 = vld [vmem:[#allocation12 + $0x140] sm:$0xff]
          %v1611 = vld [vmem:[#allocation12 + $0x148] sm:$0xff]
          %v1612 = vld [vmem:[#allocation12 + $0x150] sm:$0xff]
          %v1613 = vld [vmem:[#allocation12 + $0x158] sm:$0xff]
          %v1614 = vld [vmem:[#allocation12 + $0x160] sm:$0xff]
          %v1615 = vld [vmem:[#allocation12 + $0x168] sm:$0xff]
          %v1616 = vld [vmem:[#allocation12 + $0x170] sm:$0xff]
          %v1617 = vld [vmem:[#allocation12 + $0x178] sm:$0xff]
          %v1618 = vld [vmem:[#allocation12 + $0x180] sm:$0xff]
          %v1619 = vld [vmem:[#allocation12 + $0x188] sm:$0xff]
          %v1620 = vld [vmem:[#allocation12 + $0x190] sm:$0xff]
          %v1621 = vld [vmem:[#allocation12 + $0x198] sm:$0xff]
          %v1622 = vld [vmem:[#allocation12 + $0x1a0] sm:$0xff]
          %v1623 = vld [vmem:[#allocation12 + $0x1a8] sm:$0xff]
          %v1624 = vld [vmem:[#allocation12 + $0x1b0] sm:$0xff]
          %v1625 = vld [vmem:[#allocation12 + $0x1b8] sm:$0xff]
          %v1626 = vld [vmem:[#allocation12 + $0x1c0] sm:$0xff]
          %v1627 = vld [vmem:[#allocation12 + $0x1c8] sm:$0xff]
          %v1628 = vld [vmem:[#allocation12 + $0x1d0] sm:$0xff]
          %v1629 = vld [vmem:[#allocation12 + $0x1d8] sm:$0xff]
          %v1630 = vld [vmem:[#allocation12 + $0x1e0] sm:$0xff]
          %v1631 = vld [vmem:[#allocation12 + $0x1e8] sm:$0xff]
          %v1632 = vld [vmem:[#allocation12 + $0x1f0] sm:$0xff]
          %v1633 = vld [vmem:[#allocation12 + $0x1f8] sm:$0xff]
          %v1634 = vld [vmem:[#allocation12 + $0x200] sm:$0xff]
          %v1635 = vld [vmem:[#allocation12 + $0x208] sm:$0xff]
          %v1636 = vld [vmem:[#allocation12 + $0x210] sm:$0xff]
          %v1637 = vld [vmem:[#allocation12 + $0x218] sm:$0xff]
          %v1638 = vld [vmem:[#allocation12 + $0x220] sm:$0xff]
          %v1639 = vld [vmem:[#allocation12 + $0x228] sm:$0xff]
          %v1640 = vld [vmem:[#allocation12 + $0x230] sm:$0xff]
          %v1641 = vld [vmem:[#allocation12 + $0x238] sm:$0xff]
          %v1642 = vld [vmem:[#allocation12 + $0x240] sm:$0xff]
          %v1643 = vld [vmem:[#allocation12 + $0x248] sm:$0xff]
          %v1644 = vld [vmem:[#allocation12 + $0x250] sm:$0xff]
          %v1645 = vld [vmem:[#allocation12 + $0x258] sm:$0xff]
          %v1646 = vld [vmem:[#allocation12 + $0x260] sm:$0xff]
          %v1647 = vld [vmem:[#allocation12 + $0x268] sm:$0xff]
          %v1648 = vld [vmem:[#allocation12 + $0x270] sm:$0xff]
          %v1649 = vld [vmem:[#allocation12 + $0x278] sm:$0xff]
          %v1650 = vld [vmem:[#allocation12 + $0x280] sm:$0xff]
          %v1651 = vld [vmem:[#allocation12 + $0x288] sm:$0xff]
          %v1652 = vld [vmem:[#allocation12 + $0x290] sm:$0xff]
          %v1653 = vld [vmem:[#allocation12 + $0x298] sm:$0xff]
          %v1654 = vld [vmem:[#allocation12 + $0x2a0] sm:$0xff]
          %v1655 = vld [vmem:[#allocation12 + $0x2a8] sm:$0xff]
          %v1656 = vld [vmem:[#allocation12 + $0x2b0] sm:$0xff]
          %v1657 = vld [vmem:[#allocation12 + $0x2b8] sm:$0xff]
          %v1658 = vld [vmem:[#allocation12 + $0x2c0] sm:$0xff]
          %v1659 = vld [vmem:[#allocation12 + $0x2c8] sm:$0xff]
          %v1660 = vld [vmem:[#allocation12 + $0x2d0] sm:$0xff]
          %v1661 = vld [vmem:[#allocation12 + $0x2d8] sm:$0xff]
          %v1662 = vld [vmem:[#allocation12 + $0x2e0] sm:$0xff]
          %v1663 = vld [vmem:[#allocation12 + $0x2e8] sm:$0xff]
          %v1664 = vld [vmem:[#allocation12 + $0x2f0] sm:$0xff]
          %v1665 = vld [vmem:[#allocation12 + $0x2f8] sm:$0xff]
          %v1666 = vld [vmem:[#allocation12 + $0x300] sm:$0xff]
          %v1667 = vld [vmem:[#allocation12 + $0x308] sm:$0xff]
          %v1668 = vld [vmem:[#allocation12 + $0x310] sm:$0xff]
          %v1669 = vld [vmem:[#allocation12 + $0x318] sm:$0xff]
          %v1670 = vld [vmem:[#allocation12 + $0x320] sm:$0xff]
          %v1671 = vld [vmem:[#allocation12 + $0x328] sm:$0xff]
          %v1672 = vld [vmem:[#allocation12 + $0x330] sm:$0xff]
          %v1673 = vld [vmem:[#allocation12 + $0x338] sm:$0xff]
          %v1674 = vld [vmem:[#allocation12 + $0x340] sm:$0xff]
          %v1675 = vld [vmem:[#allocation12 + $0x348] sm:$0xff]
          %v1676 = vld [vmem:[#allocation12 + $0x350] sm:$0xff]
          %v1677 = vld [vmem:[#allocation12 + $0x358] sm:$0xff]
          %v1678 = vld [vmem:[#allocation12 + $0x360] sm:$0xff]
          %v1679 = vld [vmem:[#allocation12 + $0x368] sm:$0xff]
          %v1680 = vld [vmem:[#allocation12 + $0x370] sm:$0xff]
          %v1681 = vld [vmem:[#allocation12 + $0x378] sm:$0xff]
          %v1682 = vld [vmem:[#allocation12 + $0x380] sm:$0xff]
          %v1683 = vld [vmem:[#allocation12 + $0x388] sm:$0xff]
          %v1684 = vld [vmem:[#allocation12 + $0x390] sm:$0xff]
          %v1685 = vld [vmem:[#allocation12 + $0x398] sm:$0xff]
          %v1686 = vld [vmem:[#allocation12 + $0x3a0] sm:$0xff]
          %v1687 = vld [vmem:[#allocation12 + $0x3a8] sm:$0xff]
          %v1688 = vld [vmem:[#allocation12 + $0x3b0] sm:$0xff]
          %v1689 = vld [vmem:[#allocation12 + $0x3b8] sm:$0xff]
          %v1690 = vld [vmem:[#allocation12 + $0x3c0] sm:$0xff]
          %v1691 = vld [vmem:[#allocation12 + $0x3c8] sm:$0xff]
          %v1692 = vld [vmem:[#allocation12 + $0x3d0] sm:$0xff]
          %v1693 = vld [vmem:[#allocation12 + $0x3d8] sm:$0xff]
          %v1694 = vld [vmem:[#allocation12 + $0x3e0] sm:$0xff]
          %v1695 = vld [vmem:[#allocation12 + $0x3e8] sm:$0xff]
          %v1696 = vld [vmem:[#allocation12 + $0x3f0] sm:$0xff]
          %v1697 = vld [vmem:[#allocation12 + $0x3f8] sm:$0xff]
          %v1826 = vunpack.c.l.b16 %v1570
          %v1827 = vunpack.c.h.b16 %v1570
          %v1828 = vunpack.c.l.b16 %v1571
          %v1829 = vunpack.c.h.b16 %v1571
          %v1830 = vunpack.c.l.b16 %v1572
          %v1831 = vunpack.c.h.b16 %v1572
          %v1832 = vunpack.c.l.b16 %v1573
          %v1833 = vunpack.c.h.b16 %v1573
          %v1834 = vunpack.c.l.b16 %v1574
          %v1835 = vunpack.c.h.b16 %v1574
          %v1836 = vunpack.c.l.b16 %v1575
          %v1837 = vunpack.c.h.b16 %v1575
          %v1838 = vunpack.c.l.b16 %v1576
          %v1839 = vunpack.c.h.b16 %v1576
          %v1840 = vunpack.c.l.b16 %v1577
          %v1841 = vunpack.c.h.b16 %v1577
          %v1842 = vunpack.c.l.b16 %v1578
          %v1843 = vunpack.c.h.b16 %v1578
          %v1844 = vunpack.c.l.b16 %v1579
          %v1845 = vunpack.c.h.b16 %v1579
          %v1846 = vunpack.c.l.b16 %v1580
          %v1847 = vunpack.c.h.b16 %v1580
          %v1848 = vunpack.c.l.b16 %v1581
          %v1849 = vunpack.c.h.b16 %v1581
          %v1850 = vunpack.c.l.b16 %v1582
          %v1851 = vunpack.c.h.b16 %v1582
          %v1852 = vunpack.c.l.b16 %v1583
          %v1853 = vunpack.c.h.b16 %v1583
          %v1854 = vunpack.c.l.b16 %v1584
          %v1855 = vunpack.c.h.b16 %v1584
          %v1856 = vunpack.c.l.b16 %v1585
          %v1857 = vunpack.c.h.b16 %v1585
          %v1858 = vunpack.c.l.b16 %v1586
          %v1859 = vunpack.c.h.b16 %v1586
          %v1860 = vunpack.c.l.b16 %v1587
          %v1861 = vunpack.c.h.b16 %v1587
          %v1862 = vunpack.c.l.b16 %v1588
          %v1863 = vunpack.c.h.b16 %v1588
          %v1864 = vunpack.c.l.b16 %v1589
          %v1865 = vunpack.c.h.b16 %v1589
          %v1866 = vunpack.c.l.b16 %v1590
          %v1867 = vunpack.c.h.b16 %v1590
          %v1868 = vunpack.c.l.b16 %v1591
          %v1869 = vunpack.c.h.b16 %v1591
          %v1870 = vunpack.c.l.b16 %v1592
          %v1871 = vunpack.c.h.b16 %v1592
          %v1872 = vunpack.c.l.b16 %v1593
          %v1873 = vunpack.c.h.b16 %v1593
          %v1874 = vunpack.c.l.b16 %v1594
          %v1875 = vunpack.c.h.b16 %v1594
          %v1876 = vunpack.c.l.b16 %v1595
          %v1877 = vunpack.c.h.b16 %v1595
          %v1878 = vunpack.c.l.b16 %v1596
          %v1879 = vunpack.c.h.b16 %v1596
          %v1880 = vunpack.c.l.b16 %v1597
          %v1881 = vunpack.c.h.b16 %v1597
          %v1882 = vunpack.c.l.b16 %v1598
          %v1883 = vunpack.c.h.b16 %v1598
          %v1884 = vunpack.c.l.b16 %v1599
          %v1885 = vunpack.c.h.b16 %v1599
          %v1886 = vunpack.c.l.b16 %v1600
          %v1887 = vunpack.c.h.b16 %v1600
          %v1888 = vunpack.c.l.b16 %v1601
          %v1889 = vunpack.c.h.b16 %v1601
          %v1890 = vunpack.c.l.b16 %v1602
          %v1891 = vunpack.c.h.b16 %v1602
          %v1892 = vunpack.c.l.b16 %v1603
          %v1893 = vunpack.c.h.b16 %v1603
          %v1894 = vunpack.c.l.b16 %v1604
          %v1895 = vunpack.c.h.b16 %v1604
          %v1896 = vunpack.c.l.b16 %v1605
          %v1897 = vunpack.c.h.b16 %v1605
          %v1898 = vunpack.c.l.b16 %v1606
          %v1899 = vunpack.c.h.b16 %v1606
          %v1900 = vunpack.c.l.b16 %v1607
          %v1901 = vunpack.c.h.b16 %v1607
          %v1902 = vunpack.c.l.b16 %v1608
          %v1903 = vunpack.c.h.b16 %v1608
          %v1904 = vunpack.c.l.b16 %v1609
          %v1905 = vunpack.c.h.b16 %v1609
          %v1906 = vunpack.c.l.b16 %v1610
          %v1907 = vunpack.c.h.b16 %v1610
          %v1908 = vunpack.c.l.b16 %v1611
          %v1909 = vunpack.c.h.b16 %v1611
          %v1910 = vunpack.c.l.b16 %v1612
          %v1911 = vunpack.c.h.b16 %v1612
          %v1912 = vunpack.c.l.b16 %v1613
          %v1913 = vunpack.c.h.b16 %v1613
          %v1914 = vunpack.c.l.b16 %v1614
          %v1915 = vunpack.c.h.b16 %v1614
          %v1916 = vunpack.c.l.b16 %v1615
          %v1917 = vunpack.c.h.b16 %v1615
          %v1918 = vunpack.c.l.b16 %v1616
          %v1919 = vunpack.c.h.b16 %v1616
          %v1920 = vunpack.c.l.b16 %v1617
          %v1921 = vunpack.c.h.b16 %v1617
          %v1922 = vunpack.c.l.b16 %v1618
          %v1923 = vunpack.c.h.b16 %v1618
          %v1924 = vunpack.c.l.b16 %v1619
          %v1925 = vunpack.c.h.b16 %v1619
          %v1926 = vunpack.c.l.b16 %v1620
          %v1927 = vunpack.c.h.b16 %v1620
          %v1928 = vunpack.c.l.b16 %v1621
          %v1929 = vunpack.c.h.b16 %v1621
          %v1930 = vunpack.c.l.b16 %v1622
          %v1931 = vunpack.c.h.b16 %v1622
          %v1932 = vunpack.c.l.b16 %v1623
          %v1933 = vunpack.c.h.b16 %v1623
          %v1934 = vunpack.c.l.b16 %v1624
          %v1935 = vunpack.c.h.b16 %v1624
          %v1936 = vunpack.c.l.b16 %v1625
          %v1937 = vunpack.c.h.b16 %v1625
          %v1938 = vunpack.c.l.b16 %v1626
          %v1939 = vunpack.c.h.b16 %v1626
          %v1940 = vunpack.c.l.b16 %v1627
          %v1941 = vunpack.c.h.b16 %v1627
          %v1942 = vunpack.c.l.b16 %v1628
          %v1943 = vunpack.c.h.b16 %v1628
          %v1944 = vunpack.c.l.b16 %v1629
          %v1945 = vunpack.c.h.b16 %v1629
          %v1946 = vunpack.c.l.b16 %v1630
          %v1947 = vunpack.c.h.b16 %v1630
          %v1948 = vunpack.c.l.b16 %v1631
          %v1949 = vunpack.c.h.b16 %v1631
          %v1950 = vunpack.c.l.b16 %v1632
          %v1951 = vunpack.c.h.b16 %v1632
          %v1952 = vunpack.c.l.b16 %v1633
          %v1953 = vunpack.c.h.b16 %v1633
          %v1954 = vunpack.c.l.b16 %v1634
          %v1955 = vunpack.c.h.b16 %v1634
          %v1956 = vunpack.c.l.b16 %v1635
          %v1957 = vunpack.c.h.b16 %v1635
          %v1958 = vunpack.c.l.b16 %v1636
          %v1959 = vunpack.c.h.b16 %v1636
          %v1960 = vunpack.c.l.b16 %v1637
          %v1961 = vunpack.c.h.b16 %v1637
          %v1962 = vunpack.c.l.b16 %v1638
          %v1963 = vunpack.c.h.b16 %v1638
          %v1964 = vunpack.c.l.b16 %v1639
          %v1965 = vunpack.c.h.b16 %v1639
          %v1966 = vunpack.c.l.b16 %v1640
          %v1967 = vunpack.c.h.b16 %v1640
          %v1968 = vunpack.c.l.b16 %v1641
          %v1969 = vunpack.c.h.b16 %v1641
          %v1970 = vunpack.c.l.b16 %v1642
          %v1971 = vunpack.c.h.b16 %v1642
          %v1972 = vunpack.c.l.b16 %v1643
          %v1973 = vunpack.c.h.b16 %v1643
          %v1974 = vunpack.c.l.b16 %v1644
          %v1975 = vunpack.c.h.b16 %v1644
          %v1976 = vunpack.c.l.b16 %v1645
          %v1977 = vunpack.c.h.b16 %v1645
          %v1978 = vunpack.c.l.b16 %v1646
          %v1979 = vunpack.c.h.b16 %v1646
          %v1980 = vunpack.c.l.b16 %v1647
          %v1981 = vunpack.c.h.b16 %v1647
          %v1982 = vunpack.c.l.b16 %v1648
          %v1983 = vunpack.c.h.b16 %v1648
          %v1984 = vunpack.c.l.b16 %v1649
          %v1985 = vunpack.c.h.b16 %v1649
          %v1986 = vunpack.c.l.b16 %v1650
          %v1987 = vunpack.c.h.b16 %v1650
          %v1988 = vunpack.c.l.b16 %v1651
          %v1989 = vunpack.c.h.b16 %v1651
          %v1990 = vunpack.c.l.b16 %v1652
          %v1991 = vunpack.c.h.b16 %v1652
          %v1992 = vunpack.c.l.b16 %v1653
          %v1993 = vunpack.c.h.b16 %v1653
          %v1994 = vunpack.c.l.b16 %v1654
          %v1995 = vunpack.c.h.b16 %v1654
          %v1996 = vunpack.c.l.b16 %v1655
          %v1997 = vunpack.c.h.b16 %v1655
          %v1998 = vunpack.c.l.b16 %v1656
          %v1999 = vunpack.c.h.b16 %v1656
          %v2000 = vunpack.c.l.b16 %v1657
          %v2001 = vunpack.c.h.b16 %v1657
          %v2002 = vunpack.c.l.b16 %v1658
          %v2003 = vunpack.c.h.b16 %v1658
          %v2004 = vunpack.c.l.b16 %v1659
          %v2005 = vunpack.c.h.b16 %v1659
          %v2006 = vunpack.c.l.b16 %v1660
          %v2007 = vunpack.c.h.b16 %v1660
          %v2008 = vunpack.c.l.b16 %v1661
          %v2009 = vunpack.c.h.b16 %v1661
          %v2010 = vunpack.c.l.b16 %v1662
          %v2011 = vunpack.c.h.b16 %v1662
          %v2012 = vunpack.c.l.b16 %v1663
          %v2013 = vunpack.c.h.b16 %v1663
          %v2014 = vunpack.c.l.b16 %v1664
          %v2015 = vunpack.c.h.b16 %v1664
          %v2016 = vunpack.c.l.b16 %v1665
          %v2017 = vunpack.c.h.b16 %v1665
          %v2018 = vunpack.c.l.b16 %v1666
          %v2019 = vunpack.c.h.b16 %v1666
          %v2020 = vunpack.c.l.b16 %v1667
          %v2021 = vunpack.c.h.b16 %v1667
          %v2022 = vunpack.c.l.b16 %v1668
          %v2023 = vunpack.c.h.b16 %v1668
          %v2024 = vunpack.c.l.b16 %v1669
          %v2025 = vunpack.c.h.b16 %v1669
          %v2026 = vunpack.c.l.b16 %v1670
          %v2027 = vunpack.c.h.b16 %v1670
          %v2028 = vunpack.c.l.b16 %v1671
          %v2029 = vunpack.c.h.b16 %v1671
          %v2030 = vunpack.c.l.b16 %v1672
          %v2031 = vunpack.c.h.b16 %v1672
          %v2032 = vunpack.c.l.b16 %v1673
          %v2033 = vunpack.c.h.b16 %v1673
          %v2034 = vunpack.c.l.b16 %v1674
          %v2035 = vunpack.c.h.b16 %v1674
          %v2036 = vunpack.c.l.b16 %v1675
          %v2037 = vunpack.c.h.b16 %v1675
          %v2038 = vunpack.c.l.b16 %v1676
          %v2039 = vunpack.c.h.b16 %v1676
          %v2040 = vunpack.c.l.b16 %v1677
          %v2041 = vunpack.c.h.b16 %v1677
          %v2042 = vunpack.c.l.b16 %v1678
          %v2043 = vunpack.c.h.b16 %v1678
          %v2044 = vunpack.c.l.b16 %v1679
          %v2045 = vunpack.c.h.b16 %v1679
          %v2046 = vunpack.c.l.b16 %v1680
          %v2047 = vunpack.c.h.b16 %v1680
          %v2048 = vunpack.c.l.b16 %v1681
          %v2049 = vunpack.c.h.b16 %v1681
          %v2050 = vunpack.c.l.b16 %v1682
          %v2051 = vunpack.c.h.b16 %v1682
          %v2052 = vunpack.c.l.b16 %v1683
          %v2053 = vunpack.c.h.b16 %v1683
          %v2054 = vunpack.c.l.b16 %v1684
          %v2055 = vunpack.c.h.b16 %v1684
          %v2056 = vunpack.c.l.b16 %v1685
          %v2057 = vunpack.c.h.b16 %v1685
          %v2058 = vunpack.c.l.b16 %v1686
          %v2059 = vunpack.c.h.b16 %v1686
          %v2060 = vunpack.c.l.b16 %v1687
          %v2061 = vunpack.c.h.b16 %v1687
          %v2062 = vunpack.c.l.b16 %v1688
          %v2063 = vunpack.c.h.b16 %v1688
          %v2064 = vunpack.c.l.b16 %v1689
          %v2065 = vunpack.c.h.b16 %v1689
          %v2066 = vunpack.c.l.b16 %v1690
          %v2067 = vunpack.c.h.b16 %v1690
          %v2068 = vunpack.c.l.b16 %v1691
          %v2069 = vunpack.c.h.b16 %v1691
          %v2070 = vunpack.c.l.b16 %v1692
          %v2071 = vunpack.c.h.b16 %v1692
          %v2072 = vunpack.c.l.b16 %v1693
          %v2073 = vunpack.c.h.b16 %v1693
          %v2074 = vunpack.c.l.b16 %v1694
          %v2075 = vunpack.c.h.b16 %v1694
          %v2076 = vunpack.c.l.b16 %v1695
          %v2077 = vunpack.c.h.b16 %v1695
          %v2078 = vunpack.c.l.b16 %v1696
          %v2079 = vunpack.c.h.b16 %v1696
          %v2080 = vunpack.c.l.b16 %v1697
          %v2081 = vunpack.c.h.b16 %v1697
          %v2082 = vpack.c.b16 %v1830, %v1826
          %v2083 = vpack.c.b16 %v1831, %v1827
          %v2084 = vpack.c.b16 %v1832, %v1828
          %v2085 = vpack.c.b16 %v1833, %v1829
          %v2086 = vpack.c.b16 %v1838, %v1834
          %v2087 = vpack.c.b16 %v1839, %v1835
          %v2088 = vpack.c.b16 %v1840, %v1836
          %v2089 = vpack.c.b16 %v1841, %v1837
          %v2090 = vpack.c.b16 %v1846, %v1842
          %v2091 = vpack.c.b16 %v1847, %v1843
          %v2092 = vpack.c.b16 %v1848, %v1844
          %v2093 = vpack.c.b16 %v1849, %v1845
          %v2094 = vpack.c.b16 %v1854, %v1850
          %v2095 = vpack.c.b16 %v1855, %v1851
          %v2096 = vpack.c.b16 %v1856, %v1852
          %v2097 = vpack.c.b16 %v1857, %v1853
          %v2098 = vpack.c.b16 %v1862, %v1858
          %v2099 = vpack.c.b16 %v1863, %v1859
          %v2100 = vpack.c.b16 %v1864, %v1860
          %v2101 = vpack.c.b16 %v1865, %v1861
          %v2102 = vpack.c.b16 %v1870, %v1866
          %v2103 = vpack.c.b16 %v1871, %v1867
          %v2104 = vpack.c.b16 %v1872, %v1868
          %v2105 = vpack.c.b16 %v1873, %v1869
          %v2106 = vpack.c.b16 %v1878, %v1874
          %v2107 = vpack.c.b16 %v1879, %v1875
          %v2108 = vpack.c.b16 %v1880, %v1876
          %v2109 = vpack.c.b16 %v1881, %v1877
          %v2110 = vpack.c.b16 %v1886, %v1882
          %v2111 = vpack.c.b16 %v1887, %v1883
          %v2112 = vpack.c.b16 %v1888, %v1884
          %v2113 = vpack.c.b16 %v1889, %v1885
          %v2114 = vpack.c.b16 %v1894, %v1890
          %v2115 = vpack.c.b16 %v1895, %v1891
          %v2116 = vpack.c.b16 %v1896, %v1892
          %v2117 = vpack.c.b16 %v1897, %v1893
          %v2118 = vpack.c.b16 %v1902, %v1898
          %v2119 = vpack.c.b16 %v1903, %v1899
          %v2120 = vpack.c.b16 %v1904, %v1900
          %v2121 = vpack.c.b16 %v1905, %v1901
          %v2122 = vpack.c.b16 %v1910, %v1906
          %v2123 = vpack.c.b16 %v1911, %v1907
          %v2124 = vpack.c.b16 %v1912, %v1908
          %v2125 = vpack.c.b16 %v1913, %v1909
          %v2126 = vpack.c.b16 %v1918, %v1914
          %v2127 = vpack.c.b16 %v1919, %v1915
          %v2128 = vpack.c.b16 %v1920, %v1916
          %v2129 = vpack.c.b16 %v1921, %v1917
          %v2130 = vpack.c.b16 %v1926, %v1922
          %v2131 = vpack.c.b16 %v1927, %v1923
          %v2132 = vpack.c.b16 %v1928, %v1924
          %v2133 = vpack.c.b16 %v1929, %v1925
          %v2134 = vpack.c.b16 %v1934, %v1930
          %v2135 = vpack.c.b16 %v1935, %v1931
          %v2136 = vpack.c.b16 %v1936, %v1932
          %v2137 = vpack.c.b16 %v1937, %v1933
          %v2138 = vpack.c.b16 %v1942, %v1938
          %v2139 = vpack.c.b16 %v1943, %v1939
          %v2140 = vpack.c.b16 %v1944, %v1940
          %v2141 = vpack.c.b16 %v1945, %v1941
          %v2142 = vpack.c.b16 %v1950, %v1946
          %v2143 = vpack.c.b16 %v1951, %v1947
          %v2144 = vpack.c.b16 %v1952, %v1948
          %v2145 = vpack.c.b16 %v1953, %v1949
          %v2146 = vpack.c.b16 %v1958, %v1954
          %v2147 = vpack.c.b16 %v1959, %v1955
          %v2148 = vpack.c.b16 %v1960, %v1956
          %v2149 = vpack.c.b16 %v1961, %v1957
          %v2150 = vpack.c.b16 %v1966, %v1962
          %v2151 = vpack.c.b16 %v1967, %v1963
          %v2152 = vpack.c.b16 %v1968, %v1964
          %v2153 = vpack.c.b16 %v1969, %v1965
          %v2154 = vpack.c.b16 %v1974, %v1970
          %v2155 = vpack.c.b16 %v1975, %v1971
          %v2156 = vpack.c.b16 %v1976, %v1972
          %v2157 = vpack.c.b16 %v1977, %v1973
          %v2158 = vpack.c.b16 %v1982, %v1978
          %v2159 = vpack.c.b16 %v1983, %v1979
          %v2160 = vpack.c.b16 %v1984, %v1980
          %v2161 = vpack.c.b16 %v1985, %v1981
          %v2162 = vpack.c.b16 %v1990, %v1986
          %v2163 = vpack.c.b16 %v1991, %v1987
          %v2164 = vpack.c.b16 %v1992, %v1988
          %v2165 = vpack.c.b16 %v1993, %v1989
          %v2166 = vpack.c.b16 %v1998, %v1994
          %v2167 = vpack.c.b16 %v1999, %v1995
          %v2168 = vpack.c.b16 %v2000, %v1996
          %v2169 = vpack.c.b16 %v2001, %v1997
          %v2170 = vpack.c.b16 %v2006, %v2002
          %v2171 = vpack.c.b16 %v2007, %v2003
          %v2172 = vpack.c.b16 %v2008, %v2004
          %v2173 = vpack.c.b16 %v2009, %v2005
          %v2174 = vpack.c.b16 %v2014, %v2010
          %v2175 = vpack.c.b16 %v2015, %v2011
          %v2176 = vpack.c.b16 %v2016, %v2012
          %v2177 = vpack.c.b16 %v2017, %v2013
          %v2178 = vpack.c.b16 %v2022, %v2018
          %v2179 = vpack.c.b16 %v2023, %v2019
          %v2180 = vpack.c.b16 %v2024, %v2020
          %v2181 = vpack.c.b16 %v2025, %v2021
          %v2182 = vpack.c.b16 %v2030, %v2026
          %v2183 = vpack.c.b16 %v2031, %v2027
          %v2184 = vpack.c.b16 %v2032, %v2028
          %v2185 = vpack.c.b16 %v2033, %v2029
          %v2186 = vpack.c.b16 %v2038, %v2034
          %v2187 = vpack.c.b16 %v2039, %v2035
          %v2188 = vpack.c.b16 %v2040, %v2036
          %v2189 = vpack.c.b16 %v2041, %v2037
          %v2190 = vpack.c.b16 %v2046, %v2042
          %v2191 = vpack.c.b16 %v2047, %v2043
          %v2192 = vpack.c.b16 %v2048, %v2044
          %v2193 = vpack.c.b16 %v2049, %v2045
          %v2194 = vpack.c.b16 %v2054, %v2050
          %v2195 = vpack.c.b16 %v2055, %v2051
          %v2196 = vpack.c.b16 %v2056, %v2052
          %v2197 = vpack.c.b16 %v2057, %v2053
          %v2198 = vpack.c.b16 %v2062, %v2058
          %v2199 = vpack.c.b16 %v2063, %v2059
          %v2200 = vpack.c.b16 %v2064, %v2060
          %v2201 = vpack.c.b16 %v2065, %v2061
          %v2202 = vpack.c.b16 %v2070, %v2066
          %v2203 = vpack.c.b16 %v2071, %v2067
          %v2204 = vpack.c.b16 %v2072, %v2068
          %v2205 = vpack.c.b16 %v2073, %v2069
          %v2206 = vpack.c.b16 %v2078, %v2074
          %v2207 = vpack.c.b16 %v2079, %v2075
          %v2208 = vpack.c.b16 %v2080, %v2076
          %v2209 = vpack.c.b16 %v2081, %v2077
          %2338 = vmatprep.subr.bf16.mxu0 %v2111
          %2339 = vmatpush1.bf16.msra.mxu0 %v2110
          %2340 = vmatprep.subr.bf16.mxu0 %v2107
          %2341 = vmatpush1.bf16.msra.mxu0 %v2106
          %2342 = vmatprep.subr.bf16.mxu0 %v2103
          %2343 = vmatpush1.bf16.msra.mxu0 %v2102
          %2344 = vmatprep.subr.bf16.mxu0 %v2099
          %2345 = vmatpush1.bf16.msra.mxu0 %v2098
          %2346 = vmatprep.subr.bf16.mxu0 %v2095
          %2347 = vmatpush1.bf16.msra.mxu0 %v2094
          %2348 = vmatprep.subr.bf16.mxu0 %v2091
          %2349 = vmatpush1.bf16.msra.mxu0 %v2090
          %2350 = vmatprep.subr.bf16.mxu0 %v2087
          %2351 = vmatpush1.bf16.msra.mxu0 %v2086
          %2352 = vmatprep.subr.bf16.mxu0 %v2083
          %2353 = vmatpush1.bf16.msra.mxu0 %v2082
          %2354 = vmatprep.subr.bf16.mxu0 %v2143
          %2355 = vmatpush2.bf16.msra.mxu0 %v2142
          %2356 = vmatprep.subr.bf16.mxu0 %v2139
          %2357 = vmatpush2.bf16.msra.mxu0 %v2138
          %2358 = vmatprep.subr.bf16.mxu0 %v2135
          %2359 = vmatpush2.bf16.msra.mxu0 %v2134
          %2360 = vmatprep.subr.bf16.mxu0 %v2131
          %2361 = vmatpush2.bf16.msra.mxu0 %v2130
          %2362 = vmatprep.subr.bf16.mxu0 %v2127
          %2363 = vmatpush2.bf16.msra.mxu0 %v2126
          %2364 = vmatprep.subr.bf16.mxu0 %v2123
          %2365 = vmatpush2.bf16.msra.mxu0 %v2122
          %2366 = vmatprep.subr.bf16.mxu0 %v2119
          %2367 = vmatpush2.bf16.msra.mxu0 %v2118
          %2368 = vmatprep.subr.bf16.mxu0 %v2115
          %2369 = vmatpush2.bf16.msra.mxu0 %v2114
          %2370 = vmatprep.mubr.bf16.mxu0 %v1567
          %2371 = vmatmul.mubr.bf16.gmra.mxu0 %v1566
          %v2372 = vpop.f32.mrf.mxu0
          %v2373 = vadd.f32 0.0, %v2372
          %v2374 = vpop.f32.mrf.mxu0
          %v2375 = vadd.f32 0.0, %v2374
          %v2376 = vpop.f32.mrf.mxu0
          %v2377 = vadd.f32 0.0, %v2376
          %v2378 = vpop.f32.mrf.mxu0
          %v2379 = vadd.f32 0.0, %v2378
          %2380 = vdwg.mxu0
          %2381 = vmatprep.subr.bf16.mxu0 %v2175
          %2382 = vmatpush1.bf16.msra.mxu0 %v2174
          %2383 = vmatprep.subr.bf16.mxu0 %v2171
          %2384 = vmatpush1.bf16.msra.mxu0 %v2170
          %2385 = vmatprep.subr.bf16.mxu0 %v2167
          %2386 = vmatpush1.bf16.msra.mxu0 %v2166
          %2387 = vmatprep.subr.bf16.mxu0 %v2163
          %2388 = vmatpush1.bf16.msra.mxu0 %v2162
          %2389 = vmatprep.subr.bf16.mxu0 %v2159
          %2390 = vmatpush1.bf16.msra.mxu0 %v2158
          %2391 = vmatprep.subr.bf16.mxu0 %v2155
          %2392 = vmatpush1.bf16.msra.mxu0 %v2154
          %2393 = vmatprep.subr.bf16.mxu0 %v2151
          %2394 = vmatpush1.bf16.msra.mxu0 %v2150
          %2395 = vmatprep.subr.bf16.mxu0 %v2147
          %2396 = vmatpush1.bf16.msra.mxu0 %v2146
          %2397 = vmatprep.subr.bf16.mxu0 %v2207
          %2398 = vmatpush2.bf16.msra.mxu0 %v2206
          %2399 = vmatprep.subr.bf16.mxu0 %v2203
          %2400 = vmatpush2.bf16.msra.mxu0 %v2202
          %2401 = vmatprep.subr.bf16.mxu0 %v2199
          %2402 = vmatpush2.bf16.msra.mxu0 %v2198
          %2403 = vmatprep.subr.bf16.mxu0 %v2195
          %2404 = vmatpush2.bf16.msra.mxu0 %v2194
          %2405 = vmatprep.subr.bf16.mxu0 %v2191
          %2406 = vmatpush2.bf16.msra.mxu0 %v2190
          %2407 = vmatprep.subr.bf16.mxu0 %v2187
          %2408 = vmatpush2.bf16.msra.mxu0 %v2186
          %2409 = vmatprep.subr.bf16.mxu0 %v2183
          %2410 = vmatpush2.bf16.msra.mxu0 %v2182
          %2411 = vmatprep.subr.bf16.mxu0 %v2179
          %2412 = vmatpush2.bf16.msra.mxu0 %v2178
          %2413 = vmatprep.mubr.bf16.mxu0 %v1569
          %2414 = vmatmul.mubr.bf16.gmra.mxu0 %v1568
          %v2415 = vpop.f32.mrf.mxu0
          %v2416 = vadd.f32 %v2373, %v2415
          %v2417 = vpop.f32.mrf.mxu0
          %v2418 = vadd.f32 %v2375, %v2417
          %v2419 = vpop.f32.mrf.mxu0
          %v2420 = vadd.f32 %v2377, %v2419
          %v2421 = vpop.f32.mrf.mxu0
          %v2422 = vadd.f32 %v2379, %v2421
          %2423 = vdwg.mxu0
          %2424 = vmatprep.subr.bf16.mxu0 %v2113
          %2425 = vmatpush1.bf16.msra.mxu0 %v2112
          %2426 = vmatprep.subr.bf16.mxu0 %v2109
          %2427 = vmatpush1.bf16.msra.mxu0 %v2108
          %2428 = vmatprep.subr.bf16.mxu0 %v2105
          %2429 = vmatpush1.bf16.msra.mxu0 %v2104
          %2430 = vmatprep.subr.bf16.mxu0 %v2101
          %2431 = vmatpush1.bf16.msra.mxu0 %v2100
          %2432 = vmatprep.subr.bf16.mxu0 %v2097
          %2433 = vmatpush1.bf16.msra.mxu0 %v2096
          %2434 = vmatprep.subr.bf16.mxu0 %v2093
          %2435 = vmatpush1.bf16.msra.mxu0 %v2092
          %2436 = vmatprep.subr.bf16.mxu0 %v2089
          %2437 = vmatpush1.bf16.msra.mxu0 %v2088
          %2438 = vmatprep.subr.bf16.mxu0 %v2085
          %2439 = vmatpush1.bf16.msra.mxu0 %v2084
          %2440 = vmatprep.subr.bf16.mxu0 %v2145
          %2441 = vmatpush2.bf16.msra.mxu0 %v2144
          %2442 = vmatprep.subr.bf16.mxu0 %v2141
          %2443 = vmatpush2.bf16.msra.mxu0 %v2140
          %2444 = vmatprep.subr.bf16.mxu0 %v2137
          %2445 = vmatpush2.bf16.msra.mxu0 %v2136
          %2446 = vmatprep.subr.bf16.mxu0 %v2133
          %2447 = vmatpush2.bf16.msra.mxu0 %v2132
          %2448 = vmatprep.subr.bf16.mxu0 %v2129
          %2449 = vmatpush2.bf16.msra.mxu0 %v2128
          %2450 = vmatprep.subr.bf16.mxu0 %v2125
          %2451 = vmatpush2.bf16.msra.mxu0 %v2124
          %2452 = vmatprep.subr.bf16.mxu0 %v2121
          %2453 = vmatpush2.bf16.msra.mxu0 %v2120
          %2454 = vmatprep.subr.bf16.mxu0 %v2117
          %2455 = vmatpush2.bf16.msra.mxu0 %v2116
          %2456 = vmatprep.mubr.bf16.mxu0 %v1567
          %2457 = vmatmul.mubr.bf16.gmra.mxu0 %v1566
          %v2458 = vpop.f32.mrf.mxu0
          %v2459 = vadd.f32 0.0, %v2458
          %v2460 = vpop.f32.mrf.mxu0
          %v2461 = vadd.f32 0.0, %v2460
          %v2462 = vpop.f32.mrf.mxu0
          %v2463 = vadd.f32 0.0, %v2462
          %v2464 = vpop.f32.mrf.mxu0
          %v2465 = vadd.f32 0.0, %v2464
          %2466 = vdwg.mxu0
          %2467 = vmatprep.subr.bf16.mxu0 %v2177
          %2468 = vmatpush1.bf16.msra.mxu0 %v2176
          %2469 = vmatprep.subr.bf16.mxu0 %v2173
          %2470 = vmatpush1.bf16.msra.mxu0 %v2172
          %2471 = vmatprep.subr.bf16.mxu0 %v2169
          %2472 = vmatpush1.bf16.msra.mxu0 %v2168
          %2473 = vmatprep.subr.bf16.mxu0 %v2165
          %2474 = vmatpush1.bf16.msra.mxu0 %v2164
          %2475 = vmatprep.subr.bf16.mxu0 %v2161
          %2476 = vmatpush1.bf16.msra.mxu0 %v2160
          %2477 = vmatprep.subr.bf16.mxu0 %v2157
          %2478 = vmatpush1.bf16.msra.mxu0 %v2156
          %2479 = vmatprep.subr.bf16.mxu0 %v2153
          %2480 = vmatpush1.bf16.msra.mxu0 %v2152
          %2481 = vmatprep.subr.bf16.mxu0 %v2149
          %2482 = vmatpush1.bf16.msra.mxu0 %v2148
          %2483 = vmatprep.subr.bf16.mxu0 %v2209
          %2484 = vmatpush2.bf16.msra.mxu0 %v2208
          %2485 = vmatprep.subr.bf16.mxu0 %v2205
          %2486 = vmatpush2.bf16.msra.mxu0 %v2204
          %2487 = vmatprep.subr.bf16.mxu0 %v2201
          %2488 = vmatpush2.bf16.msra.mxu0 %v2200
          %2489 = vmatprep.subr.bf16.mxu0 %v2197
          %2490 = vmatpush2.bf16.msra.mxu0 %v2196
          %2491 = vmatprep.subr.bf16.mxu0 %v2193
          %2492 = vmatpush2.bf16.msra.mxu0 %v2192
          %2493 = vmatprep.subr.bf16.mxu0 %v2189
          %2494 = vmatpush2.bf16.msra.mxu0 %v2188
          %2495 = vmatprep.subr.bf16.mxu0 %v2185
          %2496 = vmatpush2.bf16.msra.mxu0 %v2184
          %2497 = vmatprep.subr.bf16.mxu0 %v2181
          %2498 = vmatpush2.bf16.msra.mxu0 %v2180
          %2499 = vmatprep.mubr.bf16.mxu0 %v1569
          %2500 = vmatmul.mubr.bf16.gmra.mxu0 %v1568
          %v2501 = vpop.f32.mrf.mxu0
          %v2502 = vadd.f32 %v2459, %v2501
          %v2503 = vpop.f32.mrf.mxu0
          %v2504 = vadd.f32 %v2461, %v2503
          %v2505 = vpop.f32.mrf.mxu0
          %v2506 = vadd.f32 %v2463, %v2505
          %v2507 = vpop.f32.mrf.mxu0
          %v2508 = vadd.f32 %v2465, %v2507
          %2509 = vdwg.mxu0
          %v2510 = vadd.f32 %v1558, %v2416
          %v2511 = vadd.f32 %v1559, %v2418
          %v2512 = vadd.f32 %v1560, %v2502
          %v2513 = vadd.f32 %v1561, %v2504
          %v2514 = vadd.f32 %v1562, %v2420
          %v2515 = vadd.f32 %v1563, %v2422
          %v2516 = vadd.f32 %v1564, %v2506
          %v2517 = vadd.f32 %v1565, %v2508
          %v2518 = vld [vmem:[%s6] sm:$0xf]
          %v2520 = vlaneseq
          %v2521 = vshrl.u32 %v2520, 7
          %v2522 = vsub.s32 0, %v2521
          %v2523 = vrot.slane %v2518, %v2522
          %v2524 = vlaneseq
          %v2525 = vshrl.u32 %v2524, 7
          %v2526 = vsub.s32 1, %v2525
          %v2527 = vrot.slane %v2518, %v2526
          %v2528 = vlaneseq
          %v2529 = vshrl.u32 %v2528, 7
          %v2530 = vsub.s32 2, %v2529
          %v2531 = vrot.slane %v2518, %v2530
          %v2532 = vlaneseq
          %v2533 = vshrl.u32 %v2532, 7
          %v2534 = vsub.s32 3, %v2533
          %v2535 = vrot.slane %v2518, %v2534
          %v2540 = vadd.f32 %v2510, %v2523
          %v2541 = vadd.f32 %v2511, %v2527
          %v2542 = vadd.f32 %v2512, %v2531
          %v2543 = vadd.f32 %v2513, %v2535
          %v2544 = vadd.f32 %v2514, %v2523
          %v2545 = vadd.f32 %v2515, %v2527
          %v2546 = vadd.f32 %v2516, %v2531
          %v2547 = vadd.f32 %v2517, %v2535
          %2548 = vst [vmem:[#allocation14] sm:$0xff] %v1550
          %2549 = vst [vmem:[#allocation14 + $0x8] sm:$0xff] %v1551
          %2550 = vst [vmem:[#allocation14 + $0x10] sm:$0xff] %v1552
          %2551 = vst [vmem:[#allocation14 + $0x18] sm:$0xff] %v1553
          %2552 = vst [vmem:[#allocation14 + $0x20] sm:$0xff] %v1554
          %2553 = vst [vmem:[#allocation14 + $0x28] sm:$0xff] %v1555
          %2554 = vst [vmem:[#allocation14 + $0x30] sm:$0xff] %v1556
          %2555 = vst [vmem:[#allocation14 + $0x38] sm:$0xff] %v1557
          %2556 = vst [vmem:[#allocation13] sm:$0xff] %v2540
          %2557 = vst [vmem:[#allocation13 + $0x8] sm:$0xff] %v2541
          %2558 = vst [vmem:[#allocation13 + $0x10] sm:$0xff] %v2542
          %2559 = vst [vmem:[#allocation13 + $0x18] sm:$0xff] %v2543
          %2560 = vst [vmem:[#allocation13 + $0x20] sm:$0xff] %v2544
          %2561 = vst [vmem:[#allocation13 + $0x28] sm:$0xff] %v2545
          %2562 = vst [vmem:[#allocation13 + $0x30] sm:$0xff] %v2546
          %2563 = vst [vmem:[#allocation13 + $0x38] sm:$0xff] %v2547
        $region76: #{tpu_custom_call.1} parent=47 // pred_fallthru
          _
        // Predicated region
        $region77: #{tpu_custom_call.1} parent=47 // pred_check
          %p2564 = pneg %p232
        $region78: #{tpu_custom_call.1} parent=47 // pred_check_branch
          %2566 = sbr.rel (%p2564) target = $region80
        $region79: #{tpu_custom_call.1} parent=47 // pred_region
          %s2567 = smul.u32 2, %s35
          %s2569 = ssub.s32 1024, 1024
          %2570 = vsyncadd [#allocation6], %s2569
          %s2571 = smul.addr %s2567, 4
          %s2572 = smul.addr %s2571, 128
          %s2573 = scalar_lea.hbm %s7, %s2572
          %s2574 = sshll.u32 [#allocation13], 4
          %s2575 = int_to_ptr.vmem [resolvable:$true] %s2574
          %2580 = dma.vmem_to_hbm [thread:$0]  %s2575, 1024, %s2573, [#allocation6], 512, 512, 32
        $region80: #{tpu_custom_call.1} parent=47 // pred_fallthru
          _
        // Predicated region
        $region81: #{tpu_custom_call.1} parent=47 // pred_check
          %p2581 = pneg %p258
        $region82: #{tpu_custom_call.1} parent=47 // pred_check_branch
          %2583 = sbr.rel (%p2581) target = $region84
        $region83: #{tpu_custom_call.1} parent=47 // pred_region
          %s2584 = smul.u32 2, %s35
          %s2586 = ssub.s32 1024, 1024
          %2587 = vsyncadd [#allocation15], %s2586
          %s2588 = smul.addr %s2584, 4
          %s2589 = smul.addr %s2588, 128
          %s2590 = scalar_lea.hbm %s8, %s2589
          %s2591 = sshll.u32 [#allocation14], 4
          %s2592 = int_to_ptr.vmem [resolvable:$true] %s2591
          %2597 = dma.vmem_to_hbm [thread:$0]  %s2592, 1024, %s2590, [#allocation15], 512, 512, 32
        $region84: #{tpu_custom_call.1} parent=47 // pred_fallthru
          _
        // Predicated region
        $region85: #{tpu_custom_call.1} parent=47 // pred_check
          %p2598 = pneg %p232
        $region86: #{tpu_custom_call.1} parent=47 // pred_check_branch
          %2600 = sbr.rel (%p2598) target = $region88
        $region87: #{tpu_custom_call.1} parent=47 // pred_region
          %2601 = dma.done [#allocation6], 1024
        $region88: #{tpu_custom_call.1} parent=47 // pred_fallthru
          _
        // Predicated region
        $region89: #{tpu_custom_call.1} parent=47 // pred_check
          %p2602 = pneg %p258
        $region90: #{tpu_custom_call.1} parent=47 // pred_check_branch
          %2604 = sbr.rel (%p2602) target = $region92
        $region91: #{tpu_custom_call.1} parent=47 // pred_region
          %2605 = dma.done [#allocation15], 1024
        $region92: #{tpu_custom_call.1} parent=47 // pred_fallthru
          _
      $region48: #{tpu_custom_call.1} parent=5 // pred_fallthru
        _
      %p2606 = scmp.le.s32.totalorder 2, %s26
      // Predicated region
      $region93: #{tpu_custom_call.1} parent=5 // pred_check
        %p2607 = pneg %p2606
      $region94: #{tpu_custom_call.1} parent=5 // pred_check_branch
        %2609 = sbr.rel (%p2607) target = $region96
      $region95: #{tpu_custom_call.1} parent=5 // pred_region
        %s2610 = ssub.s32 %s26, 2
      $region96: #{tpu_custom_call.1} parent=5 // pred_fallthru
        _
    $region6: #{tpu_custom_call.1} parent=1 // loop_footer
      %s30 = sadd.s32 1, %s26
    $region7: #{tpu_custom_call.1} parent=1 // loop_footer_branch
      %25 = sbr.rel target = $region3
    $region8: #{tpu_custom_call.1} parent=1 // loop_exit
      _
    %2611 = vsyncpa [#allocation5], 1
    %s2612 = scalar_lea.sflag [#allocation5], 1
    %2613 = vsyncpa %s2612, 1
    %2614 = vsyncpa [#allocation8], 1
    %s2615 = scalar_lea.sflag [#allocation8], 1
    %2616 = vsyncpa %s2615, 1
    %2617 = vsyncpa [#allocation11], 1
    %s2618 = scalar_lea.sflag [#allocation11], 1
    %2619 = vsyncpa %s2618, 1
    %2620 = vsyncpa [#allocation6], 1
    %s2621 = scalar_lea.sflag [#allocation6], 1
    %2622 = vsyncpa %s2621, 1
    %2623 = vsyncpa [#allocation15], 1

</llo_original>
